<compile_context>
chip_gen: v5e
topology: v5e:2x2
jax: 0.10.0
libtpu: 0.0.40
codegen_flags: <defaults>
</compile_context>

<pallas_src>
import functools
import math

import numpy as np
import jax
import jax.numpy as jnp
from jax import lax
from jax.experimental import pallas as pl
from jax.experimental.pallas import tpu as pltpu

N_PAD = 128          # padded event count (>= demo event count, <= 300 so no subsampling)
K = 8                # knn_graph(k=8)
BETA = 5e-6          # normalize_time beta
BIG = 1e30           # "+inf"-ish sentinel used to retire selected / self keys
SENT = 1e8           # sentinel coordinate: events outside the bbox are moved here
IDX_BITS = 7         # candidate index packed into the low mantissa bits of the key

assert N_PAD <= (1 << IDX_BITS), "candidate index must fit in the packed low key bits"
# Guard (review correctness concern): every query column always holds N_PAD-1 finite keys
# (pad columns carry finite sentinel-coordinate keys, never BIG), so the K sublane mins
# can never select a BIG key as long as K < N_PAD.
assert K < N_PAD
assert K == 8, "fused (16, N_PAD) output layout assumes exactly 8 neighbour rows"


def _build_graph_kernel(bbox_ref, evc_ref, evn_ref, out_ref):
    """Per-sample body; grid axis 0 = sample index (marked 'parallel').

    bbox_ref : SMEM (B, 4) i32   scalar-prefetched clipped crop bboxes (x, y, w, h)
    evc_ref  : VMEM (8, N) f32   channel-major events; rows 0..3 = (x, y, t, p), rows 4..7 pad
    evn_ref  : VMEM (N, 128) f32 transposed geometry; lanes 0..2 = (x, y, t), rest pad
    out_ref  : VMEM (16, N) f32  fused output slab:
               rows 0..4  = (x, y, t_norm (0 on invalid lanes), p, valid), rows 5..7 = 0,
               rows 8..15 = k-th nearest neighbour index (int32 bit pattern) per query lane.
    """
    b = pl.program_id(0)
    bx = bbox_ref[b, 0].astype(jnp.float32)
    by = bbox_ref[b, 1].astype(jnp.float32)
    bw = bbox_ref[b, 2].astype(jnp.float32)
    bh = bbox_ref[b, 3].astype(jnp.float32)

    n = evc_ref.shape[1]
    big = jnp.float32(BIG)
    beta = jnp.float32(BETA)
    sent = jnp.float32(SENT)

    # ---- lane-dense (1, N) elementwise phase --------------------------------
    x_r = evc_ref[0:1, :]
    y_r = evc_ref[1:2, :]
    t_r = evc_ref[2:3, :]
    p_r = evc_ref[3:4, :]

    valid_r = (x_r >= bx) & (x_r <= bx + bw) & (y_r >= by) & (y_r <= by + bh)   # (1, N)

    # normalize_time over the filtered events: (t - min(t_valid)) * beta
    t_min = jnp.min(jnp.where(valid_r, t_r, big))
    tn_r = (t_r - t_min) * beta

    # fold the bbox filter into the coordinates: invalid events sit at a far sentinel,
    # so they can never be selected as neighbours of a valid query.
    xm_r = jnp.where(valid_r, x_r, sent)
    ym_r = jnp.where(valid_r, y_r, sent)
    tm_r = jnp.where(valid_r, tn_r, sent)

    # ---- column views (candidate axis = sublanes) ----------------------------
    # TODO(synk): derive these in-kernel from the masked rows with an XLU transpose once
    # Mosaic transpose lowering is verified for this shape; for now the host supplies a
    # lane-padded transposed copy (one contiguous full-tile DMA) and the few masking ops
    # below are duplicated (negligible — the kernel is overhead-bound, not VPU-bound).
    x_c = evn_ref[:, 0:1]
    y_c = evn_ref[:, 1:2]
    t_c = evn_ref[:, 2:3]
    valid_c = (x_c >= bx) & (x_c <= bx + bw) & (y_c >= by) & (y_c <= by + bh)   # (N, 1)
    tn_c = (t_c - t_min) * beta
    xm_c = jnp.where(valid_c, x_c, sent)
    ym_c = jnp.where(valid_c, y_c, sent)
    tm_c = jnp.where(valid_c, tn_c, sent)

    # ---- exact, non-negative pairwise squared distances (pure VPU) -----------
    # d[j, i]: candidate j on the sublane axis, query i on the lane axis.
    dx = xm_c - xm_r
    dy = ym_c - ym_r
    dt = tm_c - tm_r
    # +1.0 keeps every packed key a normal (non-denormal) float, so the f32 min /
    # equality below is safe even for exact-duplicate events; ordering is unchanged.
    d = dx * dx + dy * dy + dt * dt + jnp.float32(1.0)              # (N, N), >= 1

    cand_ids = lax.broadcasted_iota(jnp.int32, (n, n), 0)           # candidate index j
    lane_ids = lax.broadcasted_iota(jnp.int32, (1, n), 1)           # query index i (1, N)

    # ---- packed keys: distance bits | candidate index ------------------------
    # d >= 1 so the f32 -> i32 bitcast is order-preserving; the low IDX_BITS bits carry the
    # candidate index (tie-break = lowest index, matching argmin up to key quantisation).
    hi_mask = jnp.int32(-(1 << IDX_BITS))
    idx_mask = jnp.int32((1 << IDX_BITS) - 1)
    key_bits = (pltpu.bitcast(d, jnp.int32) & hi_mask) | cand_ids
    key = pltpu.bitcast(key_bits, jnp.float32)                      # positive normal floats
    key = jnp.where(cand_ids == lane_ids, big, key)                 # loop=False: no self edges

    # ---- k = 8 nearest neighbours: one sublane min-reduce per iteration ------
    rows = []
    for _ in range(K):
        mn = jnp.min(key, axis=0, keepdims=True)                    # (1, N), lane-dense
        rows.append(pltpu.bitcast(mn, jnp.int32) & idx_mask)        # neighbour index row
        key = jnp.where(key == mn, big, key)                        # retire the selected key
    nbr_f32 = pltpu.bitcast(jnp.concatenate(rows, axis=0), jnp.float32)   # (K, N) raw bits

    # ---- fused, full-tile output slab -----------------------------------------
    tn_out = jnp.where(valid_r, tn_r, jnp.float32(0.0))             # mask invalid-lane t_norm
    zeros_pad = jnp.zeros((8 - 5, n), jnp.float32)
    aux = jnp.concatenate(
        [x_r, y_r, tn_out, p_r, valid_r.astype(jnp.float32), zeros_pad], axis=0)   # (8, N)
    out_ref[...] = jnp.concatenate([aux, nbr_f32], axis=0)          # (16, N)


@functools.lru_cache(maxsize=None)
def _make_graph_call(batch):
    grid_spec = pltpu.PrefetchScalarGridSpec(
        num_scalar_prefetch=1,               # bbox table -> SMEM, visible to index_maps
        grid=(batch,),
        in_specs=[
            pl.BlockSpec((None, 8, N_PAD), lambda b, bbox: (b, 0, 0)),
            pl.BlockSpec((None, N_PAD, 128), lambda b, bbox: (b, 0, 0)),
        ],
        out_specs=pl.BlockSpec((None, 16, N_PAD), lambda b, bbox: (b, 0, 0)),
    )
    call = pl.pallas_call(
        _build_graph_kernel,
        out_shape=jax.ShapeDtypeStruct((batch, 16, N_PAD), jnp.float32),
        grid_spec=grid_spec,
        compiler_params=pltpu.CompilerParams(
            # sample axis is embarrassingly parallel -> both TCs on v7x, no-op elsewhere
            dimension_semantics=("parallel",)),
        # TODO(synk): if N_PAD grows toward the 300-event cap, add a 128-wide query-block
        # grid axis (also "parallel") and bump IDX_BITS — the binding constraint there is
        # the 64-vreg file for the live key array, not VMEM.
    )
    return jax.jit(call)


def _prepare_sample(pos_in, x_in, gt_bbox, H, W, ratio):
    """Host-side replica of the module's integer bbox/crop arithmetic + the `< 9` guard.
    Returns (evc (8,N_PAD), evn (N_PAD,128), bbox int32 (4,)) or None."""
    # forward calls for_in_bbox(data, gt, H, W) whose params are (W, H) -> replicate the swap.
    Wp, Hp = H, W
    pos = np.asarray(pos_in, dtype=np.float32)
    pol = np.asarray(x_in, dtype=np.float32).reshape(-1)
    x_sub, y_sub, t_sub = pos[:, 0], pos[:, 1], pos[:, 2]

    x, y, w, h = [int(v) for v in np.asarray(gt_bbox)[0]]
    crop_sz = math.ceil(math.sqrt(w * h) * ratio)
    x1 = round(x + 0.5 * w - crop_sz * 0.5)
    x2 = x1 + crop_sz
    y1 = round(y + 0.5 * h - crop_sz * 0.5)
    y2 = y1 + crop_sz
    x1_pad = max(0, -x1)
    x2_pad = max(x2 - Wp + 1, 0)
    y1_pad = max(0, -y1)
    y2_pad = max(y2 - Hp + 1, 0)
    crop = [x1 + x1_pad, x2 - x2_pad, y1 + y1_pad, y2 - y2_pad]
    bb = np.array([crop[0], crop[2], crop[1] - crop[0], crop[3] - crop[2]], dtype=np.int64)
    bb[0] = np.clip(bb[0], 0, Wp)
    bb[1] = np.clip(bb[1], 0, Hp)
    bb[2] = np.clip(bb[2], 0, Wp - bb[0])
    bb[3] = np.clip(bb[3], 0, Hp - bb[1])

    in_box = ((x_sub >= bb[0]) & (x_sub <= bb[0] + bb[2]) &
              (y_sub >= bb[1]) & (y_sub <= bb[1] + bb[3]))
    if int(in_box.sum()) * 4 < 9:      # event_sub.numel() < 9  ->  forward returns None
        return None
    # TODO(synk): torch.randperm subsampling to 300 events skipped (nondeterministic RNG);
    # N_PAD <= 300 keeps the filtered count below that cap anyway.

    n = pos.shape[0]
    assert n <= N_PAD, "demo kernel sized for <= N_PAD events per sample"
    evc = np.full((8, N_PAD), -1e9, dtype=np.float32)   # pad cols sit outside any bbox
    evc[0, :n] = x_sub
    evc[1, :n] = y_sub
    evc[2, :n] = t_sub
    evc[3, :n] = pol
    evc[4:] = 0.0
    evn = np.zeros((N_PAD, 128), dtype=np.float32)      # lane-padded transposed geometry
    evn[:, :3] = evc[:3].T
    return evc, evn, bb.astype(np.int32)


def build_graph_forward_batch(samples, H, W, ratio=2):
    """Batched Build_Graph.forward: samples = [(pos (N,3), x (N,1), gt (1,4)), ...].
    Returns a list with one dict(x=, pos=, edge_index=) or None per sample."""
    prepped = [_prepare_sample(p, xx, g, H, W, ratio) for (p, xx, g) in samples]
    results = [None] * len(samples)
    live = [i for i, pr in enumerate(prepped) if pr is not None]
    if not live:
        return results

    evc = np.stack([prepped[i][0] for i in live])        # (B, 8, N_PAD)
    evn = np.stack([prepped[i][1] for i in live])        # (B, N_PAD, 128)
    bbx = np.stack([prepped[i][2] for i in live])        # (B, 4) int32

    out = _make_graph_call(len(live))(jnp.asarray(bbx), jnp.asarray(evc), jnp.asarray(evn))
    out = np.asarray(jax.block_until_ready(out))         # (B, 16, N_PAD)

    for row, i in enumerate(live):
        aux = out[row, :5]                                        # x, y, t_norm, p, valid
        nbr = np.ascontiguousarray(out[row, 8:16]).view(np.int32)  # (8, N_PAD) neighbour idx
        valid = aux[4] > 0.5
        orig = np.where(valid)[0]
        m = orig.shape[0]
        remap = -np.ones(N_PAD, dtype=np.int64)
        remap[orig] = np.arange(m)
        k = min(K, m - 1)
        nbr_sel = nbr[:k][:, orig]                        # (k, m): neighbour idx (orig numbering)
        src = remap[nbr_sel.T.reshape(-1)]                # neighbour (source) indices
        tgt = np.repeat(np.arange(m), k)                  # centre (target) indices
        edge_index = np.stack([src, tgt]).astype(np.int64)   # knn_graph flow='source_to_target'

        pos_out = np.ascontiguousarray(aux[0:3][:, orig].T).astype(np.float32)   # (m, 3)
        feat = np.ascontiguousarray(aux[3:4][:, orig].T).astype(np.float32)      # (m, 1)
        results[i] = {"x": feat, "pos": pos_out, "edge_index": edge_index}
    return results


def build_graph_forward(pos_in, x_in, gt_bbox, H, W, ratio=2):
    """Single-sample convenience wrapper mirroring Build_Graph.forward."""
    return build_graph_forward_batch([(pos_in, x_in, gt_bbox)], H, W, ratio)[0]


def _check_knn(result, k=K, rtol=1e-3, atol=1e-2):
    """Sanity check: per centre, the distances of selected neighbours match the true
    k-smallest distances (tolerant to the key's 7-bit index-packing quantisation)."""
    pos = result["pos"].astype(np.float64)
    m = pos.shape[0]
    d2 = ((pos[:, None, :] - pos[None, :, :]) ** 2).sum(-1)
    np.fill_diagonal(d2, np.inf)
    kk = min(k, m - 1)
    src, tgt = result["edge_index"]
    for i in range(m):
        sel = np.sort(d2[i, src[tgt == i]])
        ref = np.sort(d2[i])[:kk]
        assert sel.shape[0] == kk
        np.testing.assert_allclose(sel, ref, rtol=rtol, atol=atol)


if __name__ == "__main__":
    key = jax.random.PRNGKey(0)
    H = W = 64
    counts = (96, 64, 112)
    boxes = np.array([[20.0, 20.0, 16.0, 16.0],
                      [8.0, 10.0, 20.0, 12.0],
                      [30.0, 26.0, 14.0, 18.0]], dtype=np.float32)

    samples = []
    for s, n_events in enumerate(counts):
        key, k1, k2, k3, k4, k5, k6 = jax.random.split(key, 7)
        bx, by, bw, bh = [float(v) for v in boxes[s]]
        # half the events anywhere in the frame, half deterministically inside the gt box
        xa = jax.random.uniform(k1, (n_events // 2,), minval=0.0, maxval=float(W))
        ya = jax.random.uniform(k2, (n_events // 2,), minval=0.0, maxval=float(H))
        xb = jax.random.uniform(k3, (n_events - n_events // 2,), minval=bx, maxval=bx + bw)
        yb = jax.random.uniform(k4, (n_events - n_events // 2,), minval=by, maxval=by + bh)
        xs = jnp.concatenate([xa, xb])
        ys = jnp.concatenate([ya, yb])
        ts = jnp.sort(jax.random.uniform(k5, (n_events,), minval=0.0, maxval=1e5))
        ps = jax.random.bernoulli(k6, 0.5, (n_events,)).astype(jnp.float32) * 2.0 - 1.0

        pos_in = np.stack([np.asarray(xs), np.asarray(ys), np.asarray(ts)], axis=1).astype(np.float32)
        x_in = np.asarray(ps, dtype=np.float32)[:, None]
        samples.append((pos_in, x_in, boxes[s:s + 1]))

    results = build_graph_forward_batch(samples, H, W, ratio=2)
    for res in results:
        assert res is not None
        assert res["edge_index"].shape[0] == 2
        assert res["pos"].shape[1] == 3 and res["x"].shape[1] == 1
        assert res["pos"].shape[0] == res["x"].shape[0] > K
        assert int(res["edge_index"].max()) < res["pos"].shape[0]
        assert int(res["edge_index"].min()) >= 0
        _check_knn(res)

    # single-sample path (B = 1) still works and agrees on shapes
    single = build_graph_forward(samples[0][0], samples[0][1], samples[0][2], H, W, ratio=2)
    assert single is not None and single["pos"].shape == results[0]["pos"].shape
    print("KERNEL_OK")
</pallas_src>

<mosaic_0001>
module attributes {stable_mosaic.version = 11 : i64} {
  func.func @_build_graph_kernel(%arg0: i32, %arg1: memref<3x4xi32, #tpu.memory_space<smem>>, %arg2: memref<1x8x128xf32, #tpu.memory_space<vmem>>, %arg3: memref<1x128x128xf32, #tpu.memory_space<vmem>>, %arg4: memref<1x16x128xf32, #tpu.memory_space<vmem>>) attributes {dimension_semantics = [#tpu.dimension_semantics<parallel>], iteration_bounds = array<i64: 3>, scalar_prefetch = 1 : i64, scratch_operands = 0 : i64, tpu.core_type = #tpu.core_type<tc>, window_params = [{transform_indices = @transform_0, window_bounds = array<i64: 1, 8, 128>}, {transform_indices = @transform_1, window_bounds = array<i64: 1, 128, 128>}, {transform_indices = @transform_2, window_bounds = array<i64: 1, 16, 128>}]} {
    %0 = arith.index_cast %arg0 : i32 to index
    %c0 = arith.constant 0 : index
    %1 = memref.load %arg1[%0, %c0] : memref<3x4xi32, #tpu.memory_space<smem>>
    %2 = arith.sitofp %1 : i32 to f32
    %3 = arith.index_cast %arg0 : i32 to index
    %c1 = arith.constant 1 : index
    %4 = memref.load %arg1[%3, %c1] : memref<3x4xi32, #tpu.memory_space<smem>>
    %5 = arith.sitofp %4 : i32 to f32
    %6 = arith.index_cast %arg0 : i32 to index
    %c2 = arith.constant 2 : index
    %7 = memref.load %arg1[%6, %c2] : memref<3x4xi32, #tpu.memory_space<smem>>
    %8 = arith.sitofp %7 : i32 to f32
    %9 = arith.index_cast %arg0 : i32 to index
    %c3 = arith.constant 3 : index
    %10 = memref.load %arg1[%9, %c3] : memref<3x4xi32, #tpu.memory_space<smem>>
    %11 = arith.sitofp %10 : i32 to f32
    %c0_0 = arith.constant 0 : index
    %c0_1 = arith.constant 0 : index
    %c0_2 = arith.constant 0 : index
    %12 = vector.load %arg2[%c0_0, %c0_1, %c0_2] : memref<1x8x128xf32, #tpu.memory_space<vmem>>, vector<1x1x128xf32>
    %13 = vector.shape_cast %12 : vector<1x1x128xf32> to vector<1x128xf32>
    %c0_3 = arith.constant 0 : index
    %c1_4 = arith.constant 1 : index
    %c0_5 = arith.constant 0 : index
    %14 = vector.load %arg2[%c0_3, %c1_4, %c0_5] : memref<1x8x128xf32, #tpu.memory_space<vmem>>, vector<1x1x128xf32>
    %15 = vector.shape_cast %14 : vector<1x1x128xf32> to vector<1x128xf32>
    %c0_6 = arith.constant 0 : index
    %c2_7 = arith.constant 2 : index
    %c0_8 = arith.constant 0 : index
    %16 = vector.load %arg2[%c0_6, %c2_7, %c0_8] : memref<1x8x128xf32, #tpu.memory_space<vmem>>, vector<1x1x128xf32>
    %17 = vector.shape_cast %16 : vector<1x1x128xf32> to vector<1x128xf32>
    %c0_9 = arith.constant 0 : index
    %c3_10 = arith.constant 3 : index
    %c0_11 = arith.constant 0 : index
    %18 = vector.load %arg2[%c0_9, %c3_10, %c0_11] : memref<1x8x128xf32, #tpu.memory_space<vmem>>, vector<1x1x128xf32>
    %19 = vector.shape_cast %18 : vector<1x1x128xf32> to vector<1x128xf32>
    %20 = vector.broadcast %2 : f32 to vector<1x128xf32>
    %21 = arith.cmpf oge, %13, %20 : vector<1x128xf32>
    %22 = arith.addf %2, %8 : f32
    %23 = vector.broadcast %22 : f32 to vector<1x128xf32>
    %24 = arith.cmpf ole, %13, %23 : vector<1x128xf32>
    %25 = arith.andi %21, %24 : vector<1x128xi1>
    %26 = vector.broadcast %5 : f32 to vector<1x128xf32>
    %27 = arith.cmpf oge, %15, %26 : vector<1x128xf32>
    %28 = arith.andi %25, %27 : vector<1x128xi1>
    %29 = arith.addf %5, %11 : f32
    %30 = vector.broadcast %29 : f32 to vector<1x128xf32>
    %31 = arith.cmpf ole, %15, %30 : vector<1x128xf32>
    %32 = arith.andi %28, %31 : vector<1x128xi1>
    %cst = arith.constant 1.000000e+30 : f32
    %33 = vector.broadcast %cst : f32 to vector<1x128xf32>
    %34 = arith.select %32, %17, %33 : vector<1x128xi1>, vector<1x128xf32>
    %35 = vector.shape_cast %34 : vector<1x128xf32> to vector<1x1x128xf32>
    %cst_12 = arith.constant dense<0x7F800000> : vector<1xf32>
    %36 = vector.multi_reduction <minimumf>, %35, %cst_12 [1, 2] : vector<1x1x128xf32> to vector<1xf32>
    %37 = vector.shape_cast %36 : vector<1xf32> to vector<1x1x1xf32>
    %38 = vector.extract %37[0, 0, 0] : f32 from vector<1x1x1xf32>
    %39 = vector.broadcast %38 : f32 to vector<1x128xf32>
    %40 = arith.subf %17, %39 : vector<1x128xf32>
    %cst_13 = arith.constant 5.000000e-06 : f32
    %41 = vector.broadcast %cst_13 : f32 to vector<1x128xf32>
    %42 = arith.mulf %40, %41 : vector<1x128xf32>
    %cst_14 = arith.constant 1.000000e+08 : f32
    %43 = vector.broadcast %cst_14 : f32 to vector<1x128xf32>
    %44 = arith.select %32, %13, %43 : vector<1x128xi1>, vector<1x128xf32>
    %cst_15 = arith.constant 1.000000e+08 : f32
    %45 = vector.broadcast %cst_15 : f32 to vector<1x128xf32>
    %46 = arith.select %32, %15, %45 : vector<1x128xi1>, vector<1x128xf32>
    %cst_16 = arith.constant 1.000000e+08 : f32
    %47 = vector.broadcast %cst_16 : f32 to vector<1x128xf32>
    %48 = arith.select %32, %42, %47 : vector<1x128xi1>, vector<1x128xf32>
    %c0_17 = arith.constant 0 : index
    %c0_18 = arith.constant 0 : index
    %c0_19 = arith.constant 0 : index
    %49 = vector.load %arg3[%c0_17, %c0_18, %c0_19] : memref<1x128x128xf32, #tpu.memory_space<vmem>>, vector<1x128x1xf32>
    %50 = vector.shape_cast %49 : vector<1x128x1xf32> to vector<128x1xf32>
    %c0_20 = arith.constant 0 : index
    %c0_21 = arith.constant 0 : index
    %c1_22 = arith.constant 1 : index
    %51 = vector.load %arg3[%c0_20, %c0_21, %c1_22] : memref<1x128x128xf32, #tpu.memory_space<vmem>>, vector<1x128x1xf32>
    %52 = vector.shape_cast %51 : vector<1x128x1xf32> to vector<128x1xf32>
    %c0_23 = arith.constant 0 : index
    %c0_24 = arith.constant 0 : index
    %c2_25 = arith.constant 2 : index
    %53 = vector.load %arg3[%c0_23, %c0_24, %c2_25] : memref<1x128x128xf32, #tpu.memory_space<vmem>>, vector<1x128x1xf32>
    %54 = vector.shape_cast %53 : vector<1x128x1xf32> to vector<128x1xf32>
    %55 = vector.broadcast %2 : f32 to vector<128x1xf32>
    %56 = arith.cmpf oge, %50, %55 : vector<128x1xf32>
    %57 = arith.addf %2, %8 : f32
    %58 = vector.broadcast %57 : f32 to vector<128x1xf32>
    %59 = arith.cmpf ole, %50, %58 : vector<128x1xf32>
    %60 = arith.andi %56, %59 : vector<128x1xi1>
    %61 = vector.broadcast %5 : f32 to vector<128x1xf32>
    %62 = arith.cmpf oge, %52, %61 : vector<128x1xf32>
    %63 = arith.andi %60, %62 : vector<128x1xi1>
    %64 = arith.addf %5, %11 : f32
    %65 = vector.broadcast %64 : f32 to vector<128x1xf32>
    %66 = arith.cmpf ole, %52, %65 : vector<128x1xf32>
    %67 = arith.andi %63, %66 : vector<128x1xi1>
    %68 = vector.broadcast %38 : f32 to vector<128x1xf32>
    %69 = arith.subf %54, %68 : vector<128x1xf32>
    %cst_26 = arith.constant 5.000000e-06 : f32
    %70 = vector.broadcast %cst_26 : f32 to vector<128x1xf32>
    %71 = arith.mulf %69, %70 : vector<128x1xf32>
    %cst_27 = arith.constant 1.000000e+08 : f32
    %72 = vector.broadcast %cst_27 : f32 to vector<128x1xf32>
    %73 = arith.select %67, %50, %72 : vector<128x1xi1>, vector<128x1xf32>
    %cst_28 = arith.constant 1.000000e+08 : f32
    %74 = vector.broadcast %cst_28 : f32 to vector<128x1xf32>
    %75 = arith.select %67, %52, %74 : vector<128x1xi1>, vector<128x1xf32>
    %cst_29 = arith.constant 1.000000e+08 : f32
    %76 = vector.broadcast %cst_29 : f32 to vector<128x1xf32>
    %77 = arith.select %67, %71, %76 : vector<128x1xi1>, vector<128x1xf32>
    %78 = vector.broadcast %73 : vector<128x1xf32> to vector<128x128xf32>
    %79 = vector.broadcast %44 : vector<1x128xf32> to vector<128x128xf32>
    %80 = arith.subf %78, %79 : vector<128x128xf32>
    %81 = vector.broadcast %75 : vector<128x1xf32> to vector<128x128xf32>
    %82 = vector.broadcast %46 : vector<1x128xf32> to vector<128x128xf32>
    %83 = arith.subf %81, %82 : vector<128x128xf32>
    %84 = vector.broadcast %77 : vector<128x1xf32> to vector<128x128xf32>
    %85 = vector.broadcast %48 : vector<1x128xf32> to vector<128x128xf32>
    %86 = arith.subf %84, %85 : vector<128x128xf32>
    %87 = arith.mulf %80, %80 : vector<128x128xf32>
    %88 = arith.mulf %83, %83 : vector<128x128xf32>
    %89 = arith.addf %87, %88 : vector<128x128xf32>
    %90 = arith.mulf %86, %86 : vector<128x128xf32>
    %91 = arith.addf %89, %90 : vector<128x128xf32>
    %cst_30 = arith.constant 1.000000e+00 : f32
    %92 = vector.broadcast %cst_30 : f32 to vector<128x128xf32>
    %93 = arith.addf %91, %92 : vector<128x128xf32>
    %94 = tpu.iota {dimensions = array<i32: 0>} : vector<128x128xi32>
    %95 = tpu.iota {dimensions = array<i32: 1>} : vector<1x128xi32>
    %96 = tpu.bitcast %93 : vector<128x128xf32> -> vector<128x128xi32>
    %c-128_i32 = arith.constant -128 : i32
    %97 = vector.broadcast %c-128_i32 : i32 to vector<128x128xi32>
    %98 = arith.andi %96, %97 : vector<128x128xi32>
    %99 = arith.ori %98, %94 : vector<128x128xi32>
    %100 = tpu.bitcast %99 : vector<128x128xi32> -> vector<128x128xf32>
    %101 = vector.broadcast %95 : vector<1x128xi32> to vector<128x128xi32>
    %102 = arith.cmpi eq, %94, %101 : vector<128x128xi32>
    %cst_31 = arith.constant 1.000000e+30 : f32
    %103 = vector.broadcast %cst_31 : f32 to vector<128x128xf32>
    %104 = arith.select %102, %103, %100 : vector<128x128xi1>, vector<128x128xf32>
    %cst_32 = arith.constant dense<0x7F800000> : vector<128xf32>
    %105 = vector.multi_reduction <minimumf>, %104, %cst_32 [0] : vector<128x128xf32> to vector<128xf32>
    %106 = vector.shape_cast %105 : vector<128xf32> to vector<1x128xf32>
    %107 = tpu.bitcast %106 : vector<1x128xf32> -> vector<1x128xi32>
    %c127_i32 = arith.constant 127 : i32
    %108 = vector.broadcast %c127_i32 : i32 to vector<1x128xi32>
    %109 = arith.andi %107, %108 : vector<1x128xi32>
    %110 = vector.broadcast %106 : vector<1x128xf32> to vector<128x128xf32>
    %111 = arith.cmpf oeq, %104, %110 : vector<128x128xf32>
    %cst_33 = arith.constant 1.000000e+30 : f32
    %112 = vector.broadcast %cst_33 : f32 to vector<128x128xf32>
    %113 = arith.select %111, %112, %104 : vector<128x128xi1>, vector<128x128xf32>
    %cst_34 = arith.constant dense<0x7F800000> : vector<128xf32>
    %114 = vector.multi_reduction <minimumf>, %113, %cst_34 [0] : vector<128x128xf32> to vector<128xf32>
    %115 = vector.shape_cast %114 : vector<128xf32> to vector<1x128xf32>
    %116 = tpu.bitcast %115 : vector<1x128xf32> -> vector<1x128xi32>
    %c127_i32_35 = arith.constant 127 : i32
    %117 = vector.broadcast %c127_i32_35 : i32 to vector<1x128xi32>
    %118 = arith.andi %116, %117 : vector<1x128xi32>
    %119 = vector.broadcast %115 : vector<1x128xf32> to vector<128x128xf32>
    %120 = arith.cmpf oeq, %113, %119 : vector<128x128xf32>
    %cst_36 = arith.constant 1.000000e+30 : f32
    %121 = vector.broadcast %cst_36 : f32 to vector<128x128xf32>
    %122 = arith.select %120, %121, %113 : vector<128x128xi1>, vector<128x128xf32>
    %cst_37 = arith.constant dense<0x7F800000> : vector<128xf32>
    %123 = vector.multi_reduction <minimumf>, %122, %cst_37 [0] : vector<128x128xf32> to vector<128xf32>
    %124 = vector.shape_cast %123 : vector<128xf32> to vector<1x128xf32>
    %125 = tpu.bitcast %124 : vector<1x128xf32> -> vector<1x128xi32>
    %c127_i32_38 = arith.constant 127 : i32
    %126 = vector.broadcast %c127_i32_38 : i32 to vector<1x128xi32>
    %127 = arith.andi %125, %126 : vector<1x128xi32>
    %128 = vector.broadcast %124 : vector<1x128xf32> to vector<128x128xf32>
    %129 = arith.cmpf oeq, %122, %128 : vector<128x128xf32>
    %cst_39 = arith.constant 1.000000e+30 : f32
    %130 = vector.broadcast %cst_39 : f32 to vector<128x128xf32>
    %131 = arith.select %129, %130, %122 : vector<128x128xi1>, vector<128x128xf32>
    %cst_40 = arith.constant dense<0x7F800000> : vector<128xf32>
    %132 = vector.multi_reduction <minimumf>, %131, %cst_40 [0] : vector<128x128xf32> to vector<128xf32>
    %133 = vector.shape_cast %132 : vector<128xf32> to vector<1x128xf32>
    %134 = tpu.bitcast %133 : vector<1x128xf32> -> vector<1x128xi32>
    %c127_i32_41 = arith.constant 127 : i32
    %135 = vector.broadcast %c127_i32_41 : i32 to vector<1x128xi32>
    %136 = arith.andi %134, %135 : vector<1x128xi32>
    %137 = vector.broadcast %133 : vector<1x128xf32> to vector<128x128xf32>
    %138 = arith.cmpf oeq, %131, %137 : vector<128x128xf32>
    %cst_42 = arith.constant 1.000000e+30 : f32
    %139 = vector.broadcast %cst_42 : f32 to vector<128x128xf32>
    %140 = arith.select %138, %139, %131 : vector<128x128xi1>, vector<128x128xf32>
    %cst_43 = arith.constant dense<0x7F800000> : vector<128xf32>
    %141 = vector.multi_reduction <minimumf>, %140, %cst_43 [0] : vector<128x128xf32> to vector<128xf32>
    %142 = vector.shape_cast %141 : vector<128xf32> to vector<1x128xf32>
    %143 = tpu.bitcast %142 : vector<1x128xf32> -> vector<1x128xi32>
    %c127_i32_44 = arith.constant 127 : i32
    %144 = vector.broadcast %c127_i32_44 : i32 to vector<1x128xi32>
    %145 = arith.andi %143, %144 : vector<1x128xi32>
    %146 = vector.broadcast %142 : vector<1x128xf32> to vector<128x128xf32>
    %147 = arith.cmpf oeq, %140, %146 : vector<128x128xf32>
    %cst_45 = arith.constant 1.000000e+30 : f32
    %148 = vector.broadcast %cst_45 : f32 to vector<128x128xf32>
    %149 = arith.select %147, %148, %140 : vector<128x128xi1>, vector<128x128xf32>
    %cst_46 = arith.constant dense<0x7F800000> : vector<128xf32>
    %150 = vector.multi_reduction <minimumf>, %149, %cst_46 [0] : vector<128x128xf32> to vector<128xf32>
    %151 = vector.shape_cast %150 : vector<128xf32> to vector<1x128xf32>
    %152 = tpu.bitcast %151 : vector<1x128xf32> -> vector<1x128xi32>
    %c127_i32_47 = arith.constant 127 : i32
    %153 = vector.broadcast %c127_i32_47 : i32 to vector<1x128xi32>
    %154 = arith.andi %152, %153 : vector<1x128xi32>
    %155 = vector.broadcast %151 : vector<1x128xf32> to vector<128x128xf32>
    %156 = arith.cmpf oeq, %149, %155 : vector<128x128xf32>
    %cst_48 = arith.constant 1.000000e+30 : f32
    %157 = vector.broadcast %cst_48 : f32 to vector<128x128xf32>
    %158 = arith.select %156, %157, %149 : vector<128x128xi1>, vector<128x128xf32>
    %cst_49 = arith.constant dense<0x7F800000> : vector<128xf32>
    %159 = vector.multi_reduction <minimumf>, %158, %cst_49 [0] : vector<128x128xf32> to vector<128xf32>
    %160 = vector.shape_cast %159 : vector<128xf32> to vector<1x128xf32>
    %161 = tpu.bitcast %160 : vector<1x128xf32> -> vector<1x128xi32>
    %c127_i32_50 = arith.constant 127 : i32
    %162 = vector.broadcast %c127_i32_50 : i32 to vector<1x128xi32>
    %163 = arith.andi %161, %162 : vector<1x128xi32>
    %164 = vector.broadcast %160 : vector<1x128xf32> to vector<128x128xf32>
    %165 = arith.cmpf oeq, %158, %164 : vector<128x128xf32>
    %cst_51 = arith.constant 1.000000e+30 : f32
    %166 = vector.broadcast %cst_51 : f32 to vector<128x128xf32>
    %167 = arith.select %165, %166, %158 : vector<128x128xi1>, vector<128x128xf32>
    %cst_52 = arith.constant dense<0x7F800000> : vector<128xf32>
    %168 = vector.multi_reduction <minimumf>, %167, %cst_52 [0] : vector<128x128xf32> to vector<128xf32>
    %169 = vector.shape_cast %168 : vector<128xf32> to vector<1x128xf32>
    %170 = tpu.bitcast %169 : vector<1x128xf32> -> vector<1x128xi32>
    %c127_i32_53 = arith.constant 127 : i32
    %171 = vector.broadcast %c127_i32_53 : i32 to vector<1x128xi32>
    %172 = arith.andi %170, %171 : vector<1x128xi32>
    %173 = tpu.concatenate %109, %118, %127, %136, %145, %154, %163, %172 in 0 : vector<1x128xi32>, vector<1x128xi32>, vector<1x128xi32>, vector<1x128xi32>, vector<1x128xi32>, vector<1x128xi32>, vector<1x128xi32>, vector<1x128xi32> -> vector<8x128xi32>
    %174 = tpu.bitcast %173 : vector<8x128xi32> -> vector<8x128xf32>
    %cst_54 = arith.constant 0.000000e+00 : f32
    %175 = vector.broadcast %cst_54 : f32 to vector<1x128xf32>
    %176 = arith.select %32, %42, %175 : vector<1x128xi1>, vector<1x128xf32>
    %cst_55 = arith.constant 0.000000e+00 : f32
    %177 = vector.broadcast %cst_55 : f32 to vector<3x128xf32>
    %178 = arith.extui %32 : vector<1x128xi1> to vector<1x128xi32>
    %179 = arith.sitofp %178 : vector<1x128xi32> to vector<1x128xf32>
    %180 = tpu.concatenate %13, %15, %176, %19, %179, %177 in 0 : vector<1x128xf32>, vector<1x128xf32>, vector<1x128xf32>, vector<1x128xf32>, vector<1x128xf32>, vector<3x128xf32> -> vector<8x128xf32>
    %181 = tpu.concatenate %180, %174 in 0 : vector<8x128xf32>, vector<8x128xf32> -> vector<16x128xf32>
    %c0_56 = arith.constant 0 : index
    %c0_57 = arith.constant 0 : index
    %c0_58 = arith.constant 0 : index
    %182 = vector.load %arg4[%c0_56, %c0_57, %c0_58] : memref<1x16x128xf32, #tpu.memory_space<vmem>>, vector<1x16x128xf32>
    %183 = vector.shape_cast %182 : vector<1x16x128xf32> to vector<16x128xf32>
    %184 = vector.shape_cast %181 : vector<16x128xf32> to vector<1x16x128xf32>
    tpu.vector_store %arg4[%c0_56, %c0_57, %c0_58], %184 {strides = array<i32>} : memref<1x16x128xf32, #tpu.memory_space<vmem>>, vector<1x16x128xf32>,
    return
  }
  func.func @transform_0(%arg0: i32, %arg1: memref<3x4xi32, #tpu.memory_space<smem>>) -> (i32, i32, i32) {
    %c0_i32 = arith.constant 0 : i32
    %c0_i32_0 = arith.constant 0 : i32
    %c0_i32_1 = arith.constant 0 : i32
    return %arg0, %c0_i32, %c0_i32_0 : i32, i32, i32
  }
  func.func @transform_1(%arg0: i32, %arg1: memref<3x4xi32, #tpu.memory_space<smem>>) -> (i32, i32, i32) {
    %c0_i32 = arith.constant 0 : i32
    %c0_i32_0 = arith.constant 0 : i32
    %c0_i32_1 = arith.constant 0 : i32
    return %arg0, %c0_i32, %c0_i32_0 : i32, i32, i32
  }
  func.func @transform_2(%arg0: i32, %arg1: memref<3x4xi32, #tpu.memory_space<smem>>) -> (i32, i32, i32) {
    %c0_i32 = arith.constant 0 : i32
    %c0_i32_0 = arith.constant 0 : i32
    %c0_i32_1 = arith.constant 0 : i32
    return %arg0, %c0_i32, %c0_i32_0 : i32, i32, i32
  }
}

</mosaic_0001>

<llo_original>
// kernel: tpu_custom_call.1
$region0: #{tpu_custom_call.1}
  #allocation0 [shape = 'u32[]', space=smem, size = 0x4, offset = 0x4, fixed_abs, tag = 'smem constant byte address 0x4 - core index']
  #allocation1 [shape = 'u32[72,128]{1,0:T(1,128)}', space=vmem, size = 0x9000, scoped, tag = 'internal scratch']
  #allocation2 [shape = 's32[1]{0}', space=sflag, size = 0x4, scoped, tag = 'scoped memory for tpu_custom_call.1']
  #allocation3 [shape = 'u8[2048]{0}', space=smem, size = 0x800, scoped, tag = 'prefetched SMEM operand 0']
  %s0 = inlined_call_operand.hbm [shape: s32[3,4], index: 0, kind: input, shape index: {}]
  %s1 = inlined_call_operand.hbm [shape: f32[3,8,128], index: 1, kind: input, shape index: {}]
  %s2 = inlined_call_operand.hbm [shape: f32[3,128,128], index: 2, kind: input, shape index: {}]
  %s3 = inlined_call_operand.hbm [shape: f32[3,16,128], index: 3, kind: output, shape index: {}]
  %s4 = sld [smem:[#allocation0]]
  $region49: #{tpu_custom_call.1} parent=0
    _
  %s6 = ssub.s32 1, %s4
  %s7 = scalar_select 0, %s6, %s4
  %s9 = sshll.u32 %s0, 4
  %s10 = int_to_ptr.hbm [resolvable:$true] %s9
  %12 = dma.hbm_to_smem %s10, 64, [#allocation3], [#allocation2]
  %14 = dma.done [#allocation2], 64
  %15 = sfence
  $region1: #{tpu_custom_call.1} parent=0
    #allocation4 [shape = 'u8[8192]{0}', space=vmem, size = 0x2000, scoped, tag = 'input window, operand 1']
    #allocation5 [shape = 's32[2]{0}', space=sflag, size = 0x8, scoped, tag = 'scoped memory for tpu_custom_call.1']
    #allocation6 [shape = 's32[2]{0}', space=sflag, size = 0x8, scoped, tag = 'scoped memory for tpu_custom_call.1']
    #allocation7 [shape = 'u8[131072]{0}', space=vmem, size = 0x20000, scoped, tag = 'input window, operand 2']
    #allocation8 [shape = 's32[2]{0}', space=sflag, size = 0x8, scoped, tag = 'scoped memory for tpu_custom_call.1']
    #allocation9 [shape = 'u8[16384]{0}', space=vmem, size = 0x4000, scoped, tag = 'output window, operand 0']
    %16 = vsyncpa [#allocation5], 0
    %s17 = scalar_lea.sflag [#allocation5], 1
    %18 = vsyncpa %s17, 0
    %19 = vsyncpa [#allocation8], 0
    %s20 = scalar_lea.sflag [#allocation8], 1
    %21 = vsyncpa %s20, 0
    %22 = vsyncpa [#allocation6], 0
    %s23 = scalar_lea.sflag [#allocation6], 1
    %24 = vsyncpa %s23, 0
    loop: start=0, step=1, limit=5
    $region2: #{tpu_custom_call.1} parent=1 // loop_pre_header
      _
    $region3: #{tpu_custom_call.1} parent=1 // loop_header
      %s26 = sphi 0, %s30
      %p27 = scmp.ge.s32.totalorder %s26, 5
      %s36 = sphi 0, %s38
      %s39 = sphi 0, %s36
      %s40 = sphi 0, %s39
      %s56 = sphi 0, %s40
      %s62 = sphi 0, %s64
      %s65 = sphi 0, %s62
      %s66 = sphi 0, %s65
      %s82 = sphi 0, %s66
      %s88 = sphi 0, %s90
      %s91 = sphi 0, %s88
      %s92 = sphi 0, %s91
      %s108 = sphi 0, %s92
    $region4: #{tpu_custom_call.1} parent=1 // loop_header_branch
      %29 = sbr.rel (%p27) target = $region8
    $region5: #{tpu_custom_call.1} parent=1 // loop_body
      %s31 = ssub.s32 %s26, 1
      %s32 = ssub.s32 %s26, 2
      %s33 = sadd.s32 %s26, 1
      %s34 = ssub.s32 %s26, %s33
      %p35 = scmp.eq.s32.totalorder %s34, 0
      %s37 = sadd.s32 %s36, 1
      %s38 = scalar_select %p35, %s36, %s37
      %p41 = pneg %p35
      %p42 = scmp.eq.s32.totalorder %s26, 2
      %p43 = por %p41, %p42
      %p44 = scmp.ne.s32.totalorder %s36, %s39
      %p45 = scmp.eq.s32.totalorder %s26, 0
      %p46 = por %p44, %p45
      %p47 = scmp.ne.s32.totalorder %s36, %s39
      %p48 = scmp.eq.s32.totalorder %s31, 2
      %p49 = por %p47, %p48
      %p50 = scmp.ne.s32.totalorder %s39, %s40
      %p51 = scmp.eq.s32.totalorder %s31, 0
      %p52 = por %p50, %p51
      %p53 = scmp.ne.s32.totalorder %s39, %s40
      %p54 = scmp.eq.s32.totalorder %s32, 2
      %p55 = por %p53, %p54
      %p57 = scmp.ne.s32.totalorder %s40, %s56
      %p58 = scmp.eq.s32.totalorder %s32, 0
      %p59 = por %p57, %p58
      %s60 = ssub.s32 %s26, %s33
      %p61 = scmp.eq.s32.totalorder %s60, 0
      %s63 = sadd.s32 %s62, 1
      %s64 = scalar_select %p61, %s62, %s63
      %p67 = pneg %p61
      %p68 = scmp.eq.s32.totalorder %s26, 2
      %p69 = por %p67, %p68
      %p70 = scmp.ne.s32.totalorder %s62, %s65
      %p71 = scmp.eq.s32.totalorder %s26, 0
      %p72 = por %p70, %p71
      %p73 = scmp.ne.s32.totalorder %s62, %s65
      %p74 = scmp.eq.s32.totalorder %s31, 2
      %p75 = por %p73, %p74
      %p76 = scmp.ne.s32.totalorder %s65, %s66
      %p77 = scmp.eq.s32.totalorder %s31, 0
      %p78 = por %p76, %p77
      %p79 = scmp.ne.s32.totalorder %s65, %s66
      %p80 = scmp.eq.s32.totalorder %s32, 2
      %p81 = por %p79, %p80
      %p83 = scmp.ne.s32.totalorder %s66, %s82
      %p84 = scmp.eq.s32.totalorder %s32, 0
      %p85 = por %p83, %p84
      %s86 = ssub.s32 %s26, %s33
      %p87 = scmp.eq.s32.totalorder %s86, 0
      %s89 = sadd.s32 %s88, 1
      %s90 = scalar_select %p87, %s88, %s89
      %p93 = pneg %p87
      %p94 = scmp.eq.s32.totalorder %s26, 2
      %p95 = por %p93, %p94
      %p96 = scmp.ne.s32.totalorder %s88, %s91
      %p97 = scmp.eq.s32.totalorder %s26, 0
      %p98 = por %p96, %p97
      %p99 = scmp.ne.s32.totalorder %s88, %s91
      %p100 = scmp.eq.s32.totalorder %s31, 2
      %p101 = por %p99, %p100
      %p102 = scmp.ne.s32.totalorder %s91, %s92
      %p103 = scmp.eq.s32.totalorder %s31, 0
      %p104 = por %p102, %p103
      %p105 = scmp.ne.s32.totalorder %s91, %s92
      %p106 = scmp.eq.s32.totalorder %s32, 2
      %p107 = por %p105, %p106
      %p109 = scmp.ne.s32.totalorder %s92, %s108
      %p110 = scmp.eq.s32.totalorder %s32, 0
      %p111 = por %p109, %p110
      %p112 = scmp.le.s32.totalorder 1, %s26
      %p113 = scmp.lt.s32.totalorder %s26, 4
      %p114 = pnand %p112, %p113
      %p115 = pneg %p114
      // Predicated region
      $region9: #{tpu_custom_call.1} parent=5 // pred_check
        _
      $region10: #{tpu_custom_call.1} parent=5 // pred_check_branch
        %117 = sbr.rel (%p114) target = $region12
      $region11: #{tpu_custom_call.1} parent=5 // pred_region
        %s118 = ssub.s32 %s26, 1
      $region12: #{tpu_custom_call.1} parent=5 // pred_fallthru
        _
      %p119 = scmp.lt.s32.totalorder %s26, 3
      // Predicated region
      $region13: #{tpu_custom_call.1} parent=5 // pred_check
        %p120 = pneg %p119
      $region14: #{tpu_custom_call.1} parent=5 // pred_check_branch
        %122 = sbr.rel (%p120) target = $region16
      $region15: #{tpu_custom_call.1} parent=5 // pred_region
        // Predicated region
        $region17: #{tpu_custom_call.1} parent=15 // pred_check
          %p123 = pneg %p46
        $region18: #{tpu_custom_call.1} parent=15 // pred_check_branch
          %125 = sbr.rel (%p123) target = $region20
        $region19: #{tpu_custom_call.1} parent=15 // pred_region
          %s126 = sand.u32 %s36, 1
          %s127 = scalar_lea.sflag [#allocation5], %s126
          %s128 = sand.u32 %s36, 1
          %s129 = smul.addr %s128, 8
          %s130 = scalar_lea.vmem [#allocation4], %s129
          %132 = vsyncadd %s127, 0
          %s133 = smul.addr %s26, 8
          %s134 = scalar_lea.hbm %s1, %s133
          %s136 = sshll.u32 %s134, 4
          %s137 = int_to_ptr.hbm [resolvable:$true] %s136
          %s138 = sshll.u32 %s130, 4
          %s139 = int_to_ptr.vmem [resolvable:$true] %s138
          %141 = dma.hbm_to_vmem [thread:$0]  %s137, 128, %s139, %s127
        $region20: #{tpu_custom_call.1} parent=15 // pred_fallthru
          _
        // Predicated region
        $region21: #{tpu_custom_call.1} parent=15 // pred_check
          %p142 = pneg %p72
        $region22: #{tpu_custom_call.1} parent=15 // pred_check_branch
          %144 = sbr.rel (%p142) target = $region24
        $region23: #{tpu_custom_call.1} parent=15 // pred_region
          %s145 = sand.u32 %s62, 1
          %s146 = scalar_lea.sflag [#allocation8], %s145
          %s147 = sand.u32 %s62, 1
          %s148 = smul.addr %s147, 128
          %s149 = scalar_lea.vmem [#allocation7], %s148
          %151 = vsyncadd %s146, 0
          %s152 = smul.addr %s26, 16
          %s153 = smul.addr %s152, 8
          %s154 = scalar_lea.hbm %s2, %s153
          %s155 = sshll.u32 %s154, 4
          %s156 = int_to_ptr.hbm [resolvable:$true] %s155
          %s157 = sshll.u32 %s149, 4
          %s158 = int_to_ptr.vmem [resolvable:$true] %s157
          %163 = dma.hbm_to_vmem [thread:$0]  %s156, 2048, %s158, %s146, 128, 128, 8
        $region24: #{tpu_custom_call.1} parent=15 // pred_fallthru
          _
      $region16: #{tpu_custom_call.1} parent=5 // pred_fallthru
        _
      %p164 = scmp.le.s32.totalorder 1, %s26
      %p165 = scmp.lt.s32.totalorder %s26, 4
      %p166 = pnand %p164, %p165
      %p167 = pneg %p166
      // Predicated region
      $region25: #{tpu_custom_call.1} parent=5 // pred_check
        _
      $region26: #{tpu_custom_call.1} parent=5 // pred_check_branch
        %169 = sbr.rel (%p166) target = $region28
      $region27: #{tpu_custom_call.1} parent=5 // pred_region
        %s170 = ssub.s32 %s26, 1
        %s171 = sand.u32 %s39, 1
        %s172 = scalar_lea.sflag [#allocation5], %s171
        %s173 = sand.u32 %s39, 1
        %s174 = smul.addr %s173, 8
        %s175 = scalar_lea.vmem [#allocation4], %s174
        // Predicated region
        $region29: #{tpu_custom_call.1} parent=27 // pred_check
          %p176 = pneg %p52
        $region30: #{tpu_custom_call.1} parent=27 // pred_check_branch
          %178 = sbr.rel (%p176) target = $region32
        $region31: #{tpu_custom_call.1} parent=27 // pred_region
          %180 = dma.done %s172, 128
        $region32: #{tpu_custom_call.1} parent=27 // pred_fallthru
          _
        %s181 = sand.u32 %s65, 1
        %s182 = scalar_lea.sflag [#allocation8], %s181
        %s183 = sand.u32 %s65, 1
        %s184 = smul.addr %s183, 128
        %s185 = scalar_lea.vmem [#allocation7], %s184
        // Predicated region
        $region33: #{tpu_custom_call.1} parent=27 // pred_check
          %p186 = pneg %p78
        $region34: #{tpu_custom_call.1} parent=27 // pred_check_branch
          %188 = sbr.rel (%p186) target = $region36
        $region35: #{tpu_custom_call.1} parent=27 // pred_region
          %190 = dma.done %s182, 2048
        $region36: #{tpu_custom_call.1} parent=27 // pred_fallthru
          _
        %s191 = sand.u32 %s39, 1
        %s192 = scalar_lea.sflag [#allocation5], %s191
        %s193 = sand.u32 %s39, 1
        %s194 = smul.addr %s193, 8
        %s195 = scalar_lea.vmem [#allocation4], %s194
        %p196 = pneg %p52
        %p197 = pneg %p49
        %s198 = sand.u32 %s65, 1
        %s199 = scalar_lea.sflag [#allocation8], %s198
        %s200 = sand.u32 %s65, 1
        %s201 = smul.addr %s200, 128
        %s202 = scalar_lea.vmem [#allocation7], %s201
        %p203 = pneg %p78
        %p204 = pneg %p75
        %p205 = pneg %p104
        %p206 = pneg %p101
        %s207 = sand.u32 %s91, 1
        %s208 = scalar_lea.sflag [#allocation6], %s207
        %s209 = sand.u32 %s91, 1
        %s210 = smul.addr %s209, 16
        %s211 = scalar_lea.vmem [#allocation9], %s210
        %s212 = smul.u32 %s31, 128
        %s213 = sld [smem:[#allocation3 + %s212]]
        %s214 = scvt.s32.f32 %s213
        %s215 = sadd.s32 %s212, 1
        %s216 = sld [smem:[#allocation3 + %s215]]
        %s217 = scvt.s32.f32 %s216
        %s218 = sadd.s32 %s212, 2
        %s219 = sld [smem:[#allocation3 + %s218]]
        %s220 = scvt.s32.f32 %s219
        %s221 = sadd.s32 %s212, 3
        %s222 = sld [smem:[#allocation3 + %s221]]
        %s223 = scvt.s32.f32 %s222
        %v224 = vld [vmem:[%s175] sm:$0x1]
        %v225 = vld [vmem:[%s175 + $0x1] sm:$0x1]
        %v226 = vld [vmem:[%s175 + $0x2] sm:$0x1]
        %v227 = vld [vmem:[%s175 + $0x3] sm:$0x1]
        %v228 = vstv %s214
        %vm229 = vcmp.ge.f32.partialorder %v224, %v228
        %s230 = sadd.f32 %s214, %s220
        %v231 = vstv %s230
        %vm232 = vcmp.le.f32.partialorder %v224, %v231
        %vm233 = vmand %vm229, %vm232
        %v234 = vstv %s217
        %vm235 = vcmp.ge.f32.partialorder %v225, %v234
        %vm236 = vmand %vm233, %vm235
        %s237 = sadd.f32 %s217, %s223
        %v238 = vstv %s237
        %vm239 = vcmp.le.f32.partialorder %v225, %v238
        %vm240 = vmand %vm236, %vm239
        %v241 = vsel %vm240, %v226, 1e+30
        %vm242 = vcmask 1040384
        %v243 = vsel %vm242, %v241, inf
        %244 = vmin.xlane.f32.xlu0 %v243
        %v245 = vpop.xlane.xlu0 %244
        %v246 = vrot.slane %v245, 4
        %v247 = vmin.f32 %v245, %v246
        %v248 = vrot.slane %v247, 2
        %v249 = vmin.f32 %v247, %v248
        %v250 = vrot.slane %v249, 1
        %v251 = vmin.f32 %v249, %v250
        %s252 = vtos %v251
        %v253 = vstv %s252
        %v254 = vsub.f32 %v226, %v253
        %v255 = vmul.f32 %v254, 5e-06
        %v256 = vsel %vm240, %v224, 1e+08
        %v257 = vsel %vm240, %v225, 1e+08
        %v258 = vsel %vm240, %v255, 1e+08
        %v259 = vld [vmem:[%s185] sm:$0xff]
        %v260 = vld [vmem:[%s185 + $0x8] sm:$0xff]
        %v261 = vld [vmem:[%s185 + $0x10] sm:$0xff]
        %v262 = vld [vmem:[%s185 + $0x18] sm:$0xff]
        %v263 = vld [vmem:[%s185 + $0x20] sm:$0xff]
        %v264 = vld [vmem:[%s185 + $0x28] sm:$0xff]
        %v265 = vld [vmem:[%s185 + $0x30] sm:$0xff]
        %v266 = vld [vmem:[%s185 + $0x38] sm:$0xff]
        %v267 = vld [vmem:[%s185 + $0x40] sm:$0xff]
        %v268 = vld [vmem:[%s185 + $0x48] sm:$0xff]
        %v269 = vld [vmem:[%s185 + $0x50] sm:$0xff]
        %v270 = vld [vmem:[%s185 + $0x58] sm:$0xff]
        %v271 = vld [vmem:[%s185 + $0x60] sm:$0xff]
        %v272 = vld [vmem:[%s185 + $0x68] sm:$0xff]
        %v273 = vld [vmem:[%s185 + $0x70] sm:$0xff]
        %v274 = vld [vmem:[%s185 + $0x78] sm:$0xff]
        %vm275 = vcmp.ge.f32.partialorder %v259, %v228
        %vm276 = vcmp.ge.f32.partialorder %v260, %v228
        %vm277 = vcmp.ge.f32.partialorder %v261, %v228
        %vm278 = vcmp.ge.f32.partialorder %v262, %v228
        %vm279 = vcmp.ge.f32.partialorder %v263, %v228
        %vm280 = vcmp.ge.f32.partialorder %v264, %v228
        %vm281 = vcmp.ge.f32.partialorder %v265, %v228
        %vm282 = vcmp.ge.f32.partialorder %v266, %v228
        %vm283 = vcmp.ge.f32.partialorder %v267, %v228
        %vm284 = vcmp.ge.f32.partialorder %v268, %v228
        %vm285 = vcmp.ge.f32.partialorder %v269, %v228
        %vm286 = vcmp.ge.f32.partialorder %v270, %v228
        %vm287 = vcmp.ge.f32.partialorder %v271, %v228
        %vm288 = vcmp.ge.f32.partialorder %v272, %v228
        %vm289 = vcmp.ge.f32.partialorder %v273, %v228
        %vm290 = vcmp.ge.f32.partialorder %v274, %v228
        %vm291 = vcmp.le.f32.partialorder %v259, %v231
        %vm292 = vcmp.le.f32.partialorder %v260, %v231
        %vm293 = vcmp.le.f32.partialorder %v261, %v231
        %vm294 = vcmp.le.f32.partialorder %v262, %v231
        %vm295 = vcmp.le.f32.partialorder %v263, %v231
        %vm296 = vcmp.le.f32.partialorder %v264, %v231
        %vm297 = vcmp.le.f32.partialorder %v265, %v231
        %vm298 = vcmp.le.f32.partialorder %v266, %v231
        %vm299 = vcmp.le.f32.partialorder %v267, %v231
        %vm300 = vcmp.le.f32.partialorder %v268, %v231
        %vm301 = vcmp.le.f32.partialorder %v269, %v231
        %vm302 = vcmp.le.f32.partialorder %v270, %v231
        %vm303 = vcmp.le.f32.partialorder %v271, %v231
        %vm304 = vcmp.le.f32.partialorder %v272, %v231
        %vm305 = vcmp.le.f32.partialorder %v273, %v231
        %vm306 = vcmp.le.f32.partialorder %v274, %v231
        %vm307 = vmand %vm275, %vm291
        %vm308 = vmand %vm276, %vm292
        %vm309 = vmand %vm277, %vm293
        %vm310 = vmand %vm278, %vm294
        %vm311 = vmand %vm279, %vm295
        %vm312 = vmand %vm280, %vm296
        %vm313 = vmand %vm281, %vm297
        %vm314 = vmand %vm282, %vm298
        %vm315 = vmand %vm283, %vm299
        %vm316 = vmand %vm284, %vm300
        %vm317 = vmand %vm285, %vm301
        %vm318 = vmand %vm286, %vm302
        %vm319 = vmand %vm287, %vm303
        %vm320 = vmand %vm288, %vm304
        %vm321 = vmand %vm289, %vm305
        %vm322 = vmand %vm290, %vm306
        %vm323 = vcmp.ge.f32.partialorder %v259, %v234
        %vm324 = vcmp.ge.f32.partialorder %v260, %v234
        %vm325 = vcmp.ge.f32.partialorder %v261, %v234
        %vm326 = vcmp.ge.f32.partialorder %v262, %v234
        %vm327 = vcmp.ge.f32.partialorder %v263, %v234
        %vm328 = vcmp.ge.f32.partialorder %v264, %v234
        %vm329 = vcmp.ge.f32.partialorder %v265, %v234
        %vm330 = vcmp.ge.f32.partialorder %v266, %v234
        %vm331 = vcmp.ge.f32.partialorder %v267, %v234
        %vm332 = vcmp.ge.f32.partialorder %v268, %v234
        %vm333 = vcmp.ge.f32.partialorder %v269, %v234
        %vm334 = vcmp.ge.f32.partialorder %v270, %v234
        %vm335 = vcmp.ge.f32.partialorder %v271, %v234
        %vm336 = vcmp.ge.f32.partialorder %v272, %v234
        %vm337 = vcmp.ge.f32.partialorder %v273, %v234
        %vm338 = vcmp.ge.f32.partialorder %v274, %v234
        %v339 = vsel %vm323, 1, 0
        %v340 = vsel %vm324, 1, 0
        %v341 = vsel %vm325, 1, 0
        %v342 = vsel %vm326, 1, 0
        %v343 = vsel %vm327, 1, 0
        %v344 = vsel %vm328, 1, 0
        %v345 = vsel %vm329, 1, 0
        %v346 = vsel %vm330, 1, 0
        %v347 = vsel %vm331, 1, 0
        %v348 = vsel %vm332, 1, 0
        %v349 = vsel %vm333, 1, 0
        %v350 = vsel %vm334, 1, 0
        %v351 = vsel %vm335, 1, 0
        %v352 = vsel %vm336, 1, 0
        %v353 = vsel %vm337, 1, 0
        %v354 = vsel %vm338, 1, 0
        %355 = vrot.lane.b32.xlu0 %v339, 127
        %v356 = vpop.permute.xlu0 %355
        %357 = vrot.lane.b32.xlu0 %v340, 127
        %v358 = vpop.permute.xlu0 %357
        %359 = vrot.lane.b32.xlu0 %v341, 127
        %v360 = vpop.permute.xlu0 %359
        %361 = vrot.lane.b32.xlu0 %v342, 127
        %v362 = vpop.permute.xlu0 %361
        %363 = vrot.lane.b32.xlu0 %v343, 127
        %v364 = vpop.permute.xlu0 %363
        %365 = vrot.lane.b32.xlu0 %v344, 127
        %v366 = vpop.permute.xlu0 %365
        %367 = vrot.lane.b32.xlu0 %v345, 127
        %v368 = vpop.permute.xlu0 %367
        %369 = vrot.lane.b32.xlu0 %v346, 127
        %v370 = vpop.permute.xlu0 %369
        %371 = vrot.lane.b32.xlu0 %v347, 127
        %v372 = vpop.permute.xlu0 %371
        %373 = vrot.lane.b32.xlu0 %v348, 127
        %v374 = vpop.permute.xlu0 %373
        %375 = vrot.lane.b32.xlu0 %v349, 127
        %v376 = vpop.permute.xlu0 %375
        %377 = vrot.lane.b32.xlu0 %v350, 127
        %v378 = vpop.permute.xlu0 %377
        %379 = vrot.lane.b32.xlu0 %v351, 127
        %v380 = vpop.permute.xlu0 %379
        %381 = vrot.lane.b32.xlu0 %v352, 127
        %v382 = vpop.permute.xlu0 %381
        %383 = vrot.lane.b32.xlu0 %v353, 127
        %v384 = vpop.permute.xlu0 %383
        %385 = vrot.lane.b32.xlu0 %v354, 127
        %v386 = vpop.permute.xlu0 %385
        %vm387 = vcmp.ne.s32.totalorder %v356, 0
        %vm388 = vcmp.ne.s32.totalorder %v358, 0
        %vm389 = vcmp.ne.s32.totalorder %v360, 0
        %vm390 = vcmp.ne.s32.totalorder %v362, 0
        %vm391 = vcmp.ne.s32.totalorder %v364, 0
        %vm392 = vcmp.ne.s32.totalorder %v366, 0
        %vm393 = vcmp.ne.s32.totalorder %v368, 0
        %vm394 = vcmp.ne.s32.totalorder %v370, 0
        %vm395 = vcmp.ne.s32.totalorder %v372, 0
        %vm396 = vcmp.ne.s32.totalorder %v374, 0
        %vm397 = vcmp.ne.s32.totalorder %v376, 0
        %vm398 = vcmp.ne.s32.totalorder %v378, 0
        %vm399 = vcmp.ne.s32.totalorder %v380, 0
        %vm400 = vcmp.ne.s32.totalorder %v382, 0
        %vm401 = vcmp.ne.s32.totalorder %v384, 0
        %vm402 = vcmp.ne.s32.totalorder %v386, 0
        %vm403 = vmand %vm307, %vm387
        %vm404 = vmand %vm308, %vm388
        %vm405 = vmand %vm309, %vm389
        %vm406 = vmand %vm310, %vm390
        %vm407 = vmand %vm311, %vm391
        %vm408 = vmand %vm312, %vm392
        %vm409 = vmand %vm313, %vm393
        %vm410 = vmand %vm314, %vm394
        %vm411 = vmand %vm315, %vm395
        %vm412 = vmand %vm316, %vm396
        %vm413 = vmand %vm317, %vm397
        %vm414 = vmand %vm318, %vm398
        %vm415 = vmand %vm319, %vm399
        %vm416 = vmand %vm320, %vm400
        %vm417 = vmand %vm321, %vm401
        %vm418 = vmand %vm322, %vm402
        %vm419 = vcmp.le.f32.partialorder %v259, %v238
        %vm420 = vcmp.le.f32.partialorder %v260, %v238
        %vm421 = vcmp.le.f32.partialorder %v261, %v238
        %vm422 = vcmp.le.f32.partialorder %v262, %v238
        %vm423 = vcmp.le.f32.partialorder %v263, %v238
        %vm424 = vcmp.le.f32.partialorder %v264, %v238
        %vm425 = vcmp.le.f32.partialorder %v265, %v238
        %vm426 = vcmp.le.f32.partialorder %v266, %v238
        %vm427 = vcmp.le.f32.partialorder %v267, %v238
        %vm428 = vcmp.le.f32.partialorder %v268, %v238
        %vm429 = vcmp.le.f32.partialorder %v269, %v238
        %vm430 = vcmp.le.f32.partialorder %v270, %v238
        %vm431 = vcmp.le.f32.partialorder %v271, %v238
        %vm432 = vcmp.le.f32.partialorder %v272, %v238
        %vm433 = vcmp.le.f32.partialorder %v273, %v238
        %vm434 = vcmp.le.f32.partialorder %v274, %v238
        %v435 = vsel %vm419, 1, 0
        %v436 = vsel %vm420, 1, 0
        %v437 = vsel %vm421, 1, 0
        %v438 = vsel %vm422, 1, 0
        %v439 = vsel %vm423, 1, 0
        %v440 = vsel %vm424, 1, 0
        %v441 = vsel %vm425, 1, 0
        %v442 = vsel %vm426, 1, 0
        %v443 = vsel %vm427, 1, 0
        %v444 = vsel %vm428, 1, 0
        %v445 = vsel %vm429, 1, 0
        %v446 = vsel %vm430, 1, 0
        %v447 = vsel %vm431, 1, 0
        %v448 = vsel %vm432, 1, 0
        %v449 = vsel %vm433, 1, 0
        %v450 = vsel %vm434, 1, 0
        %451 = vrot.lane.b32.xlu0 %v435, 127
        %v452 = vpop.permute.xlu0 %451
        %453 = vrot.lane.b32.xlu0 %v436, 127
        %v454 = vpop.permute.xlu0 %453
        %455 = vrot.lane.b32.xlu0 %v437, 127
        %v456 = vpop.permute.xlu0 %455
        %457 = vrot.lane.b32.xlu0 %v438, 127
        %v458 = vpop.permute.xlu0 %457
        %459 = vrot.lane.b32.xlu0 %v439, 127
        %v460 = vpop.permute.xlu0 %459
        %461 = vrot.lane.b32.xlu0 %v440, 127
        %v462 = vpop.permute.xlu0 %461
        %463 = vrot.lane.b32.xlu0 %v441, 127
        %v464 = vpop.permute.xlu0 %463
        %465 = vrot.lane.b32.xlu0 %v442, 127
        %v466 = vpop.permute.xlu0 %465
        %467 = vrot.lane.b32.xlu0 %v443, 127
        %v468 = vpop.permute.xlu0 %467
        %469 = vrot.lane.b32.xlu0 %v444, 127
        %v470 = vpop.permute.xlu0 %469
        %471 = vrot.lane.b32.xlu0 %v445, 127
        %v472 = vpop.permute.xlu0 %471
        %473 = vrot.lane.b32.xlu0 %v446, 127
        %v474 = vpop.permute.xlu0 %473
        %475 = vrot.lane.b32.xlu0 %v447, 127
        %v476 = vpop.permute.xlu0 %475
        %477 = vrot.lane.b32.xlu0 %v448, 127
        %v478 = vpop.permute.xlu0 %477
        %479 = vrot.lane.b32.xlu0 %v449, 127
        %v480 = vpop.permute.xlu0 %479
        %481 = vrot.lane.b32.xlu0 %v450, 127
        %v482 = vpop.permute.xlu0 %481
        %vm483 = vcmp.ne.s32.totalorder %v452, 0
        %vm484 = vcmp.ne.s32.totalorder %v454, 0
        %vm485 = vcmp.ne.s32.totalorder %v456, 0
        %vm486 = vcmp.ne.s32.totalorder %v458, 0
        %vm487 = vcmp.ne.s32.totalorder %v460, 0
        %vm488 = vcmp.ne.s32.totalorder %v462, 0
        %vm489 = vcmp.ne.s32.totalorder %v464, 0
        %vm490 = vcmp.ne.s32.totalorder %v466, 0
        %vm491 = vcmp.ne.s32.totalorder %v468, 0
        %vm492 = vcmp.ne.s32.totalorder %v470, 0
        %vm493 = vcmp.ne.s32.totalorder %v472, 0
        %vm494 = vcmp.ne.s32.totalorder %v474, 0
        %vm495 = vcmp.ne.s32.totalorder %v476, 0
        %vm496 = vcmp.ne.s32.totalorder %v478, 0
        %vm497 = vcmp.ne.s32.totalorder %v480, 0
        %vm498 = vcmp.ne.s32.totalorder %v482, 0
        %vm499 = vmand %vm403, %vm483
        %vm500 = vmand %vm404, %vm484
        %vm501 = vmand %vm405, %vm485
        %vm502 = vmand %vm406, %vm486
        %vm503 = vmand %vm407, %vm487
        %vm504 = vmand %vm408, %vm488
        %vm505 = vmand %vm409, %vm489
        %vm506 = vmand %vm410, %vm490
        %vm507 = vmand %vm411, %vm491
        %vm508 = vmand %vm412, %vm492
        %vm509 = vmand %vm413, %vm493
        %vm510 = vmand %vm414, %vm494
        %vm511 = vmand %vm415, %vm495
        %vm512 = vmand %vm416, %vm496
        %vm513 = vmand %vm417, %vm497
        %vm514 = vmand %vm418, %vm498
        %v515 = vsub.f32 %v259, %v253
        %v516 = vsub.f32 %v260, %v253
        %v517 = vsub.f32 %v261, %v253
        %v518 = vsub.f32 %v262, %v253
        %v519 = vsub.f32 %v263, %v253
        %v520 = vsub.f32 %v264, %v253
        %v521 = vsub.f32 %v265, %v253
        %v522 = vsub.f32 %v266, %v253
        %v523 = vsub.f32 %v267, %v253
        %v524 = vsub.f32 %v268, %v253
        %v525 = vsub.f32 %v269, %v253
        %v526 = vsub.f32 %v270, %v253
        %v527 = vsub.f32 %v271, %v253
        %v528 = vsub.f32 %v272, %v253
        %v529 = vsub.f32 %v273, %v253
        %v530 = vsub.f32 %v274, %v253
        %v531 = vmul.f32 %v515, 5e-06
        %v532 = vmul.f32 %v516, 5e-06
        %v533 = vmul.f32 %v517, 5e-06
        %v534 = vmul.f32 %v518, 5e-06
        %v535 = vmul.f32 %v519, 5e-06
        %v536 = vmul.f32 %v520, 5e-06
        %v537 = vmul.f32 %v521, 5e-06
        %v538 = vmul.f32 %v522, 5e-06
        %v539 = vmul.f32 %v523, 5e-06
        %v540 = vmul.f32 %v524, 5e-06
        %v541 = vmul.f32 %v525, 5e-06
        %v542 = vmul.f32 %v526, 5e-06
        %v543 = vmul.f32 %v527, 5e-06
        %v544 = vmul.f32 %v528, 5e-06
        %v545 = vmul.f32 %v529, 5e-06
        %v546 = vmul.f32 %v530, 5e-06
        %v547 = vsel %vm499, %v259, 1e+08
        %v548 = vsel %vm500, %v260, 1e+08
        %v549 = vsel %vm501, %v261, 1e+08
        %v550 = vsel %vm502, %v262, 1e+08
        %v551 = vsel %vm503, %v263, 1e+08
        %v552 = vsel %vm504, %v264, 1e+08
        %v553 = vsel %vm505, %v265, 1e+08
        %v554 = vsel %vm506, %v266, 1e+08
        %v555 = vsel %vm507, %v267, 1e+08
        %v556 = vsel %vm508, %v268, 1e+08
        %v557 = vsel %vm509, %v269, 1e+08
        %v558 = vsel %vm510, %v270, 1e+08
        %v559 = vsel %vm511, %v271, 1e+08
        %v560 = vsel %vm512, %v272, 1e+08
        %v561 = vsel %vm513, %v273, 1e+08
        %v562 = vsel %vm514, %v274, 1e+08
        %579 = vrot.lane.b32.xlu0 %v259, 127
        %v580 = vpop.permute.xlu0 %579
        %581 = vrot.lane.b32.xlu0 %v260, 127
        %v582 = vpop.permute.xlu0 %581
        %583 = vrot.lane.b32.xlu0 %v261, 127
        %v584 = vpop.permute.xlu0 %583
        %585 = vrot.lane.b32.xlu0 %v262, 127
        %v586 = vpop.permute.xlu0 %585
        %587 = vrot.lane.b32.xlu0 %v263, 127
        %v588 = vpop.permute.xlu0 %587
        %589 = vrot.lane.b32.xlu0 %v264, 127
        %v590 = vpop.permute.xlu0 %589
        %591 = vrot.lane.b32.xlu0 %v265, 127
        %v592 = vpop.permute.xlu0 %591
        %593 = vrot.lane.b32.xlu0 %v266, 127
        %v594 = vpop.permute.xlu0 %593
        %595 = vrot.lane.b32.xlu0 %v267, 127
        %v596 = vpop.permute.xlu0 %595
        %597 = vrot.lane.b32.xlu0 %v268, 127
        %v598 = vpop.permute.xlu0 %597
        %599 = vrot.lane.b32.xlu0 %v269, 127
        %v600 = vpop.permute.xlu0 %599
        %601 = vrot.lane.b32.xlu0 %v270, 127
        %v602 = vpop.permute.xlu0 %601
        %603 = vrot.lane.b32.xlu0 %v271, 127
        %v604 = vpop.permute.xlu0 %603
        %605 = vrot.lane.b32.xlu0 %v272, 127
        %v606 = vpop.permute.xlu0 %605
        %607 = vrot.lane.b32.xlu0 %v273, 127
        %v608 = vpop.permute.xlu0 %607
        %609 = vrot.lane.b32.xlu0 %v274, 127
        %v610 = vpop.permute.xlu0 %609
        %v627 = vsel %vm499, %v580, 1e+08
        %v628 = vsel %vm500, %v582, 1e+08
        %v629 = vsel %vm501, %v584, 1e+08
        %v630 = vsel %vm502, %v586, 1e+08
        %v631 = vsel %vm503, %v588, 1e+08
        %v632 = vsel %vm504, %v590, 1e+08
        %v633 = vsel %vm505, %v592, 1e+08
        %v634 = vsel %vm506, %v594, 1e+08
        %v635 = vsel %vm507, %v596, 1e+08
        %v636 = vsel %vm508, %v598, 1e+08
        %v637 = vsel %vm509, %v600, 1e+08
        %v638 = vsel %vm510, %v602, 1e+08
        %v639 = vsel %vm511, %v604, 1e+08
        %v640 = vsel %vm512, %v606, 1e+08
        %v641 = vsel %vm513, %v608, 1e+08
        %v642 = vsel %vm514, %v610, 1e+08
        %659 = vrot.lane.b32.xlu0 %v531, 126
        %v660 = vpop.permute.xlu0 %659
        %661 = vrot.lane.b32.xlu0 %v532, 126
        %v662 = vpop.permute.xlu0 %661
        %663 = vrot.lane.b32.xlu0 %v533, 126
        %v664 = vpop.permute.xlu0 %663
        %665 = vrot.lane.b32.xlu0 %v534, 126
        %v666 = vpop.permute.xlu0 %665
        %667 = vrot.lane.b32.xlu0 %v535, 126
        %v668 = vpop.permute.xlu0 %667
        %669 = vrot.lane.b32.xlu0 %v536, 126
        %v670 = vpop.permute.xlu0 %669
        %671 = vrot.lane.b32.xlu0 %v537, 126
        %v672 = vpop.permute.xlu0 %671
        %673 = vrot.lane.b32.xlu0 %v538, 126
        %v674 = vpop.permute.xlu0 %673
        %675 = vrot.lane.b32.xlu0 %v539, 126
        %v676 = vpop.permute.xlu0 %675
        %677 = vrot.lane.b32.xlu0 %v540, 126
        %v678 = vpop.permute.xlu0 %677
        %679 = vrot.lane.b32.xlu0 %v541, 126
        %v680 = vpop.permute.xlu0 %679
        %681 = vrot.lane.b32.xlu0 %v542, 126
        %v682 = vpop.permute.xlu0 %681
        %683 = vrot.lane.b32.xlu0 %v543, 126
        %v684 = vpop.permute.xlu0 %683
        %685 = vrot.lane.b32.xlu0 %v544, 126
        %v686 = vpop.permute.xlu0 %685
        %687 = vrot.lane.b32.xlu0 %v545, 126
        %v688 = vpop.permute.xlu0 %687
        %689 = vrot.lane.b32.xlu0 %v546, 126
        %v690 = vpop.permute.xlu0 %689
        %v707 = vsel %vm499, %v660, 1e+08
        %v708 = vsel %vm500, %v662, 1e+08
        %v709 = vsel %vm501, %v664, 1e+08
        %v710 = vsel %vm502, %v666, 1e+08
        %v711 = vsel %vm503, %v668, 1e+08
        %v712 = vsel %vm504, %v670, 1e+08
        %v713 = vsel %vm505, %v672, 1e+08
        %v714 = vsel %vm506, %v674, 1e+08
        %v715 = vsel %vm507, %v676, 1e+08
        %v716 = vsel %vm508, %v678, 1e+08
        %v717 = vsel %vm509, %v680, 1e+08
        %v718 = vsel %vm510, %v682, 1e+08
        %v719 = vsel %vm511, %v684, 1e+08
        %v720 = vsel %vm512, %v686, 1e+08
        %v721 = vsel %vm513, %v688, 1e+08
        %v722 = vsel %vm514, %v690, 1e+08
        %724 = vset.pattern.permute.xlu0 0
        %725 = vperm.xlu0 %724, %v547
        %v726 = vpop.permute.xlu0 %725
        %729 = vset.pattern.permute.xlu0 0
        %730 = vperm.xlu0 %729, %v548
        %v731 = vpop.permute.xlu0 %730
        %734 = vset.pattern.permute.xlu0 0
        %735 = vperm.xlu0 %734, %v549
        %v736 = vpop.permute.xlu0 %735
        %739 = vset.pattern.permute.xlu0 0
        %740 = vperm.xlu0 %739, %v550
        %v741 = vpop.permute.xlu0 %740
        %744 = vset.pattern.permute.xlu0 0
        %745 = vperm.xlu0 %744, %v551
        %v746 = vpop.permute.xlu0 %745
        %749 = vset.pattern.permute.xlu0 0
        %750 = vperm.xlu0 %749, %v552
        %v751 = vpop.permute.xlu0 %750
        %754 = vset.pattern.permute.xlu0 0
        %755 = vperm.xlu0 %754, %v553
        %v756 = vpop.permute.xlu0 %755
        %759 = vset.pattern.permute.xlu0 0
        %760 = vperm.xlu0 %759, %v554
        %v761 = vpop.permute.xlu0 %760
        %764 = vset.pattern.permute.xlu0 0
        %765 = vperm.xlu0 %764, %v555
        %v766 = vpop.permute.xlu0 %765
        %769 = vset.pattern.permute.xlu0 0
        %770 = vperm.xlu0 %769, %v556
        %v771 = vpop.permute.xlu0 %770
        %774 = vset.pattern.permute.xlu0 0
        %775 = vperm.xlu0 %774, %v557
        %v776 = vpop.permute.xlu0 %775
        %779 = vset.pattern.permute.xlu0 0
        %780 = vperm.xlu0 %779, %v558
        %v781 = vpop.permute.xlu0 %780
        %784 = vset.pattern.permute.xlu0 0
        %785 = vperm.xlu0 %784, %v559
        %v786 = vpop.permute.xlu0 %785
        %789 = vset.pattern.permute.xlu0 0
        %790 = vperm.xlu0 %789, %v560
        %v791 = vpop.permute.xlu0 %790
        %794 = vset.pattern.permute.xlu0 0
        %795 = vperm.xlu0 %794, %v561
        %v796 = vpop.permute.xlu0 %795
        %799 = vset.pattern.permute.xlu0 0
        %800 = vperm.xlu0 %799, %v562
        %v801 = vpop.permute.xlu0 %800
        %v803 = vperm.slane %v256, 0
        %v804 = vsub.f32 %v726, %v803
        %v805 = vsub.f32 %v731, %v803
        %v806 = vsub.f32 %v736, %v803
        %v807 = vsub.f32 %v741, %v803
        %v808 = vsub.f32 %v746, %v803
        %v809 = vsub.f32 %v751, %v803
        %v810 = vsub.f32 %v756, %v803
        %v811 = vsub.f32 %v761, %v803
        %v812 = vsub.f32 %v766, %v803
        %v813 = vsub.f32 %v771, %v803
        %v814 = vsub.f32 %v776, %v803
        %v815 = vsub.f32 %v781, %v803
        %v816 = vsub.f32 %v786, %v803
        %v817 = vsub.f32 %v791, %v803
        %v818 = vsub.f32 %v796, %v803
        %v819 = vsub.f32 %v801, %v803
        %821 = vset.pattern.permute.xlu0 0
        %822 = vperm.xlu0 %821, %v627
        %v823 = vpop.permute.xlu0 %822
        %826 = vset.pattern.permute.xlu0 0
        %827 = vperm.xlu0 %826, %v628
        %v828 = vpop.permute.xlu0 %827
        %831 = vset.pattern.permute.xlu0 0
        %832 = vperm.xlu0 %831, %v629
        %v833 = vpop.permute.xlu0 %832
        %836 = vset.pattern.permute.xlu0 0
        %837 = vperm.xlu0 %836, %v630
        %v838 = vpop.permute.xlu0 %837
        %841 = vset.pattern.permute.xlu0 0
        %842 = vperm.xlu0 %841, %v631
        %v843 = vpop.permute.xlu0 %842
        %846 = vset.pattern.permute.xlu0 0
        %847 = vperm.xlu0 %846, %v632
        %v848 = vpop.permute.xlu0 %847
        %851 = vset.pattern.permute.xlu0 0
        %852 = vperm.xlu0 %851, %v633
        %v853 = vpop.permute.xlu0 %852
        %856 = vset.pattern.permute.xlu0 0
        %857 = vperm.xlu0 %856, %v634
        %v858 = vpop.permute.xlu0 %857
        %861 = vset.pattern.permute.xlu0 0
        %862 = vperm.xlu0 %861, %v635
        %v863 = vpop.permute.xlu0 %862
        %866 = vset.pattern.permute.xlu0 0
        %867 = vperm.xlu0 %866, %v636
        %v868 = vpop.permute.xlu0 %867
        %871 = vset.pattern.permute.xlu0 0
        %872 = vperm.xlu0 %871, %v637
        %v873 = vpop.permute.xlu0 %872
        %876 = vset.pattern.permute.xlu0 0
        %877 = vperm.xlu0 %876, %v638
        %v878 = vpop.permute.xlu0 %877
        %881 = vset.pattern.permute.xlu0 0
        %882 = vperm.xlu0 %881, %v639
        %v883 = vpop.permute.xlu0 %882
        %886 = vset.pattern.permute.xlu0 0
        %887 = vperm.xlu0 %886, %v640
        %v888 = vpop.permute.xlu0 %887
        %891 = vset.pattern.permute.xlu0 0
        %892 = vperm.xlu0 %891, %v641
        %v893 = vpop.permute.xlu0 %892
        %896 = vset.pattern.permute.xlu0 0
        %897 = vperm.xlu0 %896, %v642
        %v898 = vpop.permute.xlu0 %897
        %v900 = vperm.slane %v257, 0
        %v901 = vsub.f32 %v823, %v900
        %v902 = vsub.f32 %v828, %v900
        %v903 = vsub.f32 %v833, %v900
        %v904 = vsub.f32 %v838, %v900
        %v905 = vsub.f32 %v843, %v900
        %v906 = vsub.f32 %v848, %v900
        %v907 = vsub.f32 %v853, %v900
        %v908 = vsub.f32 %v858, %v900
        %v909 = vsub.f32 %v863, %v900
        %v910 = vsub.f32 %v868, %v900
        %v911 = vsub.f32 %v873, %v900
        %v912 = vsub.f32 %v878, %v900
        %v913 = vsub.f32 %v883, %v900
        %v914 = vsub.f32 %v888, %v900
        %v915 = vsub.f32 %v893, %v900
        %v916 = vsub.f32 %v898, %v900
        %918 = vset.pattern.permute.xlu0 0
        %919 = vperm.xlu0 %918, %v707
        %v920 = vpop.permute.xlu0 %919
        %923 = vset.pattern.permute.xlu0 0
        %924 = vperm.xlu0 %923, %v708
        %v925 = vpop.permute.xlu0 %924
        %928 = vset.pattern.permute.xlu0 0
        %929 = vperm.xlu0 %928, %v709
        %v930 = vpop.permute.xlu0 %929
        %933 = vset.pattern.permute.xlu0 0
        %934 = vperm.xlu0 %933, %v710
        %v935 = vpop.permute.xlu0 %934
        %938 = vset.pattern.permute.xlu0 0
        %939 = vperm.xlu0 %938, %v711
        %v940 = vpop.permute.xlu0 %939
        %943 = vset.pattern.permute.xlu0 0
        %944 = vperm.xlu0 %943, %v712
        %v945 = vpop.permute.xlu0 %944
        %948 = vset.pattern.permute.xlu0 0
        %949 = vperm.xlu0 %948, %v713
        %v950 = vpop.permute.xlu0 %949
        %953 = vset.pattern.permute.xlu0 0
        %954 = vperm.xlu0 %953, %v714
        %v955 = vpop.permute.xlu0 %954
        %958 = vset.pattern.permute.xlu0 0
        %959 = vperm.xlu0 %958, %v715
        %v960 = vpop.permute.xlu0 %959
        %963 = vset.pattern.permute.xlu0 0
        %964 = vperm.xlu0 %963, %v716
        %v965 = vpop.permute.xlu0 %964
        %968 = vset.pattern.permute.xlu0 0
        %969 = vperm.xlu0 %968, %v717
        %v970 = vpop.permute.xlu0 %969
        %973 = vset.pattern.permute.xlu0 0
        %974 = vperm.xlu0 %973, %v718
        %v975 = vpop.permute.xlu0 %974
        %978 = vset.pattern.permute.xlu0 0
        %979 = vperm.xlu0 %978, %v719
        %v980 = vpop.permute.xlu0 %979
        %983 = vset.pattern.permute.xlu0 0
        %984 = vperm.xlu0 %983, %v720
        %v985 = vpop.permute.xlu0 %984
        %988 = vset.pattern.permute.xlu0 0
        %989 = vperm.xlu0 %988, %v721
        %v990 = vpop.permute.xlu0 %989
        %993 = vset.pattern.permute.xlu0 0
        %994 = vperm.xlu0 %993, %v722
        %v995 = vpop.permute.xlu0 %994
        %v997 = vperm.slane %v258, 0
        %v998 = vsub.f32 %v920, %v997
        %v999 = vsub.f32 %v925, %v997
        %v1000 = vsub.f32 %v930, %v997
        %v1001 = vsub.f32 %v935, %v997
        %v1002 = vsub.f32 %v940, %v997
        %v1003 = vsub.f32 %v945, %v997
        %v1004 = vsub.f32 %v950, %v997
        %v1005 = vsub.f32 %v955, %v997
        %v1006 = vsub.f32 %v960, %v997
        %v1007 = vsub.f32 %v965, %v997
        %v1008 = vsub.f32 %v970, %v997
        %v1009 = vsub.f32 %v975, %v997
        %v1010 = vsub.f32 %v980, %v997
        %v1011 = vsub.f32 %v985, %v997
        %v1012 = vsub.f32 %v990, %v997
        %v1013 = vsub.f32 %v995, %v997
        %v1014 = vmul.f32 %v804, %v804
        %v1015 = vmul.f32 %v805, %v805
        %v1016 = vmul.f32 %v806, %v806
        %v1017 = vmul.f32 %v807, %v807
        %v1018 = vmul.f32 %v808, %v808
        %v1019 = vmul.f32 %v809, %v809
        %v1020 = vmul.f32 %v810, %v810
        %v1021 = vmul.f32 %v811, %v811
        %v1022 = vmul.f32 %v812, %v812
        %v1023 = vmul.f32 %v813, %v813
        %v1024 = vmul.f32 %v814, %v814
        %v1025 = vmul.f32 %v815, %v815
        %v1026 = vmul.f32 %v816, %v816
        %v1027 = vmul.f32 %v817, %v817
        %v1028 = vmul.f32 %v818, %v818
        %v1029 = vmul.f32 %v819, %v819
        %v1030 = vmul.f32 %v901, %v901
        %v1031 = vmul.f32 %v902, %v902
        %v1032 = vmul.f32 %v903, %v903
        %v1033 = vmul.f32 %v904, %v904
        %v1034 = vmul.f32 %v905, %v905
        %v1035 = vmul.f32 %v906, %v906
        %v1036 = vmul.f32 %v907, %v907
        %v1037 = vmul.f32 %v908, %v908
        %v1038 = vmul.f32 %v909, %v909
        %v1039 = vmul.f32 %v910, %v910
        %v1040 = vmul.f32 %v911, %v911
        %v1041 = vmul.f32 %v912, %v912
        %v1042 = vmul.f32 %v913, %v913
        %v1043 = vmul.f32 %v914, %v914
        %v1044 = vmul.f32 %v915, %v915
        %v1045 = vmul.f32 %v916, %v916
        %v1046 = vadd.f32 %v1014, %v1030
        %v1047 = vadd.f32 %v1015, %v1031
        %v1048 = vadd.f32 %v1016, %v1032
        %v1049 = vadd.f32 %v1017, %v1033
        %v1050 = vadd.f32 %v1018, %v1034
        %v1051 = vadd.f32 %v1019, %v1035
        %v1052 = vadd.f32 %v1020, %v1036
        %v1053 = vadd.f32 %v1021, %v1037
        %v1054 = vadd.f32 %v1022, %v1038
        %v1055 = vadd.f32 %v1023, %v1039
        %v1056 = vadd.f32 %v1024, %v1040
        %v1057 = vadd.f32 %v1025, %v1041
        %v1058 = vadd.f32 %v1026, %v1042
        %v1059 = vadd.f32 %v1027, %v1043
        %v1060 = vadd.f32 %v1028, %v1044
        %v1061 = vadd.f32 %v1029, %v1045
        %v1062 = vmul.f32 %v998, %v998
        %v1063 = vmul.f32 %v999, %v999
        %v1064 = vmul.f32 %v1000, %v1000
        %v1065 = vmul.f32 %v1001, %v1001
        %v1066 = vmul.f32 %v1002, %v1002
        %v1067 = vmul.f32 %v1003, %v1003
        %v1068 = vmul.f32 %v1004, %v1004
        %v1069 = vmul.f32 %v1005, %v1005
        %v1070 = vmul.f32 %v1006, %v1006
        %v1071 = vmul.f32 %v1007, %v1007
        %v1072 = vmul.f32 %v1008, %v1008
        %v1073 = vmul.f32 %v1009, %v1009
        %v1074 = vmul.f32 %v1010, %v1010
        %v1075 = vmul.f32 %v1011, %v1011
        %v1076 = vmul.f32 %v1012, %v1012
        %v1077 = vmul.f32 %v1013, %v1013
        %v1078 = vadd.f32 %v1046, %v1062
        %v1079 = vadd.f32 %v1047, %v1063
        %v1080 = vadd.f32 %v1048, %v1064
        %v1081 = vadd.f32 %v1049, %v1065
        %v1082 = vadd.f32 %v1050, %v1066
        %v1083 = vadd.f32 %v1051, %v1067
        %v1084 = vadd.f32 %v1052, %v1068
        %v1085 = vadd.f32 %v1053, %v1069
        %v1086 = vadd.f32 %v1054, %v1070
        %v1087 = vadd.f32 %v1055, %v1071
        %v1088 = vadd.f32 %v1056, %v1072
        %v1089 = vadd.f32 %v1057, %v1073
        %v1090 = vadd.f32 %v1058, %v1074
        %v1091 = vadd.f32 %v1059, %v1075
        %v1092 = vadd.f32 %v1060, %v1076
        %v1093 = vadd.f32 %v1061, %v1077
        %v1094 = vadd.f32 %v1078, 1.0
        %v1095 = vadd.f32 %v1079, 1.0
        %v1096 = vadd.f32 %v1080, 1.0
        %v1097 = vadd.f32 %v1081, 1.0
        %v1098 = vadd.f32 %v1082, 1.0
        %v1099 = vadd.f32 %v1083, 1.0
        %v1100 = vadd.f32 %v1084, 1.0
        %v1101 = vadd.f32 %v1085, 1.0
        %v1102 = vadd.f32 %v1086, 1.0
        %v1103 = vadd.f32 %v1087, 1.0
        %v1104 = vadd.f32 %v1088, 1.0
        %v1105 = vadd.f32 %v1089, 1.0
        %v1106 = vadd.f32 %v1090, 1.0
        %v1107 = vadd.f32 %v1091, 1.0
        %v1108 = vadd.f32 %v1092, 1.0
        %v1109 = vadd.f32 %v1093, 1.0
        %v1110 = vlaneseq
        %v1111 = vshrl.u32 %v1110, 7
        %v1112 = vadd.s32 %v1111, 8
        %v1113 = vadd.s32 %v1111, 16
        %v1114 = vadd.s32 %v1111, 24
        %v1115 = vadd.s32 %v1111, 32
        %v1116 = vadd.s32 %v1111, 40
        %v1117 = vadd.s32 %v1111, 48
        %v1118 = vadd.s32 %v1111, 56
        %v1119 = vadd.s32 %v1111, 64
        %v1120 = vadd.s32 %v1111, 72
        %v1121 = vadd.s32 %v1111, 80
        %v1122 = vadd.s32 %v1111, 88
        %v1123 = vadd.s32 %v1111, 96
        %v1124 = vadd.s32 %v1111, 104
        %v1125 = vadd.s32 %v1111, 112
        %v1126 = vadd.s32 %v1111, 120
        %v1127 = vlaneseq
        %v1128 = vand.u32 %v1127, 127
        %v1145 = vand.u32 %v1094, 4294967168
        %v1146 = vand.u32 %v1095, 4294967168
        %v1147 = vand.u32 %v1096, 4294967168
        %v1148 = vand.u32 %v1097, 4294967168
        %v1149 = vand.u32 %v1098, 4294967168
        %v1150 = vand.u32 %v1099, 4294967168
        %v1151 = vand.u32 %v1100, 4294967168
        %v1152 = vand.u32 %v1101, 4294967168
        %v1153 = vand.u32 %v1102, 4294967168
        %v1154 = vand.u32 %v1103, 4294967168
        %v1155 = vand.u32 %v1104, 4294967168
        %v1156 = vand.u32 %v1105, 4294967168
        %v1157 = vand.u32 %v1106, 4294967168
        %v1158 = vand.u32 %v1107, 4294967168
        %v1159 = vand.u32 %v1108, 4294967168
        %v1160 = vand.u32 %v1109, 4294967168
        %v1161 = vor.u32 %v1145, %v1111
        %v1162 = vor.u32 %v1146, %v1112
        %v1163 = vor.u32 %v1147, %v1113
        %v1164 = vor.u32 %v1148, %v1114
        %v1165 = vor.u32 %v1149, %v1115
        %v1166 = vor.u32 %v1150, %v1116
        %v1167 = vor.u32 %v1151, %v1117
        %v1168 = vor.u32 %v1152, %v1118
        %v1169 = vor.u32 %v1153, %v1119
        %v1170 = vor.u32 %v1154, %v1120
        %v1171 = vor.u32 %v1155, %v1121
        %v1172 = vor.u32 %v1156, %v1122
        %v1173 = vor.u32 %v1157, %v1123
        %v1174 = vor.u32 %v1158, %v1124
        %v1175 = vor.u32 %v1159, %v1125
        %v1176 = vor.u32 %v1160, %v1126
        %vm1193 = vcmp.eq.s32.totalorder %v1111, %v1128
        %vm1194 = vcmp.eq.s32.totalorder %v1112, %v1128
        %vm1195 = vcmp.eq.s32.totalorder %v1113, %v1128
        %vm1196 = vcmp.eq.s32.totalorder %v1114, %v1128
        %vm1197 = vcmp.eq.s32.totalorder %v1115, %v1128
        %vm1198 = vcmp.eq.s32.totalorder %v1116, %v1128
        %vm1199 = vcmp.eq.s32.totalorder %v1117, %v1128
        %vm1200 = vcmp.eq.s32.totalorder %v1118, %v1128
        %vm1201 = vcmp.eq.s32.totalorder %v1119, %v1128
        %vm1202 = vcmp.eq.s32.totalorder %v1120, %v1128
        %vm1203 = vcmp.eq.s32.totalorder %v1121, %v1128
        %vm1204 = vcmp.eq.s32.totalorder %v1122, %v1128
        %vm1205 = vcmp.eq.s32.totalorder %v1123, %v1128
        %vm1206 = vcmp.eq.s32.totalorder %v1124, %v1128
        %vm1207 = vcmp.eq.s32.totalorder %v1125, %v1128
        %vm1208 = vcmp.eq.s32.totalorder %v1126, %v1128
        %v1209 = vsel %vm1193, 1e+30, %v1161
        %v1210 = vsel %vm1194, 1e+30, %v1162
        %v1211 = vsel %vm1195, 1e+30, %v1163
        %v1212 = vsel %vm1196, 1e+30, %v1164
        %v1213 = vsel %vm1197, 1e+30, %v1165
        %v1214 = vsel %vm1198, 1e+30, %v1166
        %v1215 = vsel %vm1199, 1e+30, %v1167
        %v1216 = vsel %vm1200, 1e+30, %v1168
        %v1217 = vsel %vm1201, 1e+30, %v1169
        %v1218 = vsel %vm1202, 1e+30, %v1170
        %v1219 = vsel %vm1203, 1e+30, %v1171
        %v1220 = vsel %vm1204, 1e+30, %v1172
        %v1221 = vsel %vm1205, 1e+30, %v1173
        %v1222 = vsel %vm1206, 1e+30, %v1174
        %v1223 = vsel %vm1207, 1e+30, %v1175
        %v1224 = vsel %vm1208, 1e+30, %v1176
        %v1225 = vmin.f32 %v1209, %v1213
        %v1226 = vmin.f32 %v1210, %v1214
        %v1227 = vmin.f32 %v1211, %v1215
        %v1228 = vmin.f32 %v1212, %v1216
        %v1229 = vmin.f32 %v1225, %v1217
        %v1230 = vmin.f32 %v1226, %v1218
        %v1231 = vmin.f32 %v1227, %v1219
        %v1232 = vmin.f32 %v1228, %v1220
        %v1233 = vmin.f32 %v1229, %v1221
        %v1234 = vmin.f32 %v1230, %v1222
        %v1235 = vmin.f32 %v1231, %v1223
        %v1236 = vmin.f32 %v1232, %v1224
        %v1237 = vmin.f32 %v1233, %v1234
        %v1238 = vmin.f32 %v1235, %v1236
        %v1239 = vmin.f32 %v1237, %v1238
        %v1240 = vrot.slane %v1239, 4
        %v1241 = vmin.f32 %v1239, %v1240
        %v1242 = vrot.slane %v1241, 2
        %v1243 = vmin.f32 %v1241, %v1242
        %v1244 = vrot.slane %v1243, 1
        %v1245 = vmin.f32 %v1243, %v1244
        %v1247 = vand.u32 %v1245, 127
        %vm1248 = vcmp.eq.f32.partialorder %v1209, %v1245
        %vm1249 = vcmp.eq.f32.partialorder %v1210, %v1245
        %vm1250 = vcmp.eq.f32.partialorder %v1211, %v1245
        %vm1251 = vcmp.eq.f32.partialorder %v1212, %v1245
        %vm1252 = vcmp.eq.f32.partialorder %v1213, %v1245
        %vm1253 = vcmp.eq.f32.partialorder %v1214, %v1245
        %vm1254 = vcmp.eq.f32.partialorder %v1215, %v1245
        %vm1255 = vcmp.eq.f32.partialorder %v1216, %v1245
        %vm1256 = vcmp.eq.f32.partialorder %v1217, %v1245
        %vm1257 = vcmp.eq.f32.partialorder %v1218, %v1245
        %vm1258 = vcmp.eq.f32.partialorder %v1219, %v1245
        %vm1259 = vcmp.eq.f32.partialorder %v1220, %v1245
        %vm1260 = vcmp.eq.f32.partialorder %v1221, %v1245
        %vm1261 = vcmp.eq.f32.partialorder %v1222, %v1245
        %vm1262 = vcmp.eq.f32.partialorder %v1223, %v1245
        %vm1263 = vcmp.eq.f32.partialorder %v1224, %v1245
        %v1264 = vsel %vm1248, 1e+30, %v1209
        %v1265 = vsel %vm1249, 1e+30, %v1210
        %v1266 = vsel %vm1250, 1e+30, %v1211
        %v1267 = vsel %vm1251, 1e+30, %v1212
        %v1268 = vsel %vm1252, 1e+30, %v1213
        %v1269 = vsel %vm1253, 1e+30, %v1214
        %v1270 = vsel %vm1254, 1e+30, %v1215
        %v1271 = vsel %vm1255, 1e+30, %v1216
        %v1272 = vsel %vm1256, 1e+30, %v1217
        %v1273 = vsel %vm1257, 1e+30, %v1218
        %v1274 = vsel %vm1258, 1e+30, %v1219
        %v1275 = vsel %vm1259, 1e+30, %v1220
        %v1276 = vsel %vm1260, 1e+30, %v1221
        %v1277 = vsel %vm1261, 1e+30, %v1222
        %v1278 = vsel %vm1262, 1e+30, %v1223
        %v1279 = vsel %vm1263, 1e+30, %v1224
        %v1280 = vmin.f32 %v1264, %v1268
        %v1281 = vmin.f32 %v1265, %v1269
        %v1282 = vmin.f32 %v1266, %v1270
        %v1283 = vmin.f32 %v1267, %v1271
        %v1284 = vmin.f32 %v1280, %v1272
        %v1285 = vmin.f32 %v1281, %v1273
        %v1286 = vmin.f32 %v1282, %v1274
        %v1287 = vmin.f32 %v1283, %v1275
        %v1288 = vmin.f32 %v1284, %v1276
        %v1289 = vmin.f32 %v1285, %v1277
        %v1290 = vmin.f32 %v1286, %v1278
        %v1291 = vmin.f32 %v1287, %v1279
        %v1292 = vmin.f32 %v1288, %v1289
        %v1293 = vmin.f32 %v1290, %v1291
        %v1294 = vmin.f32 %v1292, %v1293
        %v1295 = vrot.slane %v1294, 4
        %v1296 = vmin.f32 %v1294, %v1295
        %v1297 = vrot.slane %v1296, 2
        %v1298 = vmin.f32 %v1296, %v1297
        %v1299 = vrot.slane %v1298, 1
        %v1300 = vmin.f32 %v1298, %v1299
        %v1302 = vand.u32 %v1300, 127
        %vm1303 = vcmp.eq.f32.partialorder %v1264, %v1300
        %vm1304 = vcmp.eq.f32.partialorder %v1265, %v1300
        %vm1305 = vcmp.eq.f32.partialorder %v1266, %v1300
        %vm1306 = vcmp.eq.f32.partialorder %v1267, %v1300
        %vm1307 = vcmp.eq.f32.partialorder %v1268, %v1300
        %vm1308 = vcmp.eq.f32.partialorder %v1269, %v1300
        %vm1309 = vcmp.eq.f32.partialorder %v1270, %v1300
        %vm1310 = vcmp.eq.f32.partialorder %v1271, %v1300
        %vm1311 = vcmp.eq.f32.partialorder %v1272, %v1300
        %vm1312 = vcmp.eq.f32.partialorder %v1273, %v1300
        %vm1313 = vcmp.eq.f32.partialorder %v1274, %v1300
        %vm1314 = vcmp.eq.f32.partialorder %v1275, %v1300
        %vm1315 = vcmp.eq.f32.partialorder %v1276, %v1300
        %vm1316 = vcmp.eq.f32.partialorder %v1277, %v1300
        %vm1317 = vcmp.eq.f32.partialorder %v1278, %v1300
        %vm1318 = vcmp.eq.f32.partialorder %v1279, %v1300
        %v1319 = vsel %vm1303, 1e+30, %v1264
        %v1320 = vsel %vm1304, 1e+30, %v1265
        %v1321 = vsel %vm1305, 1e+30, %v1266
        %v1322 = vsel %vm1306, 1e+30, %v1267
        %v1323 = vsel %vm1307, 1e+30, %v1268
        %v1324 = vsel %vm1308, 1e+30, %v1269
        %v1325 = vsel %vm1309, 1e+30, %v1270
        %v1326 = vsel %vm1310, 1e+30, %v1271
        %v1327 = vsel %vm1311, 1e+30, %v1272
        %v1328 = vsel %vm1312, 1e+30, %v1273
        %v1329 = vsel %vm1313, 1e+30, %v1274
        %v1330 = vsel %vm1314, 1e+30, %v1275
        %v1331 = vsel %vm1315, 1e+30, %v1276
        %v1332 = vsel %vm1316, 1e+30, %v1277
        %v1333 = vsel %vm1317, 1e+30, %v1278
        %v1334 = vsel %vm1318, 1e+30, %v1279
        %v1335 = vmin.f32 %v1319, %v1323
        %v1336 = vmin.f32 %v1320, %v1324
        %v1337 = vmin.f32 %v1321, %v1325
        %v1338 = vmin.f32 %v1322, %v1326
        %v1339 = vmin.f32 %v1335, %v1327
        %v1340 = vmin.f32 %v1336, %v1328
        %v1341 = vmin.f32 %v1337, %v1329
        %v1342 = vmin.f32 %v1338, %v1330
        %v1343 = vmin.f32 %v1339, %v1331
        %v1344 = vmin.f32 %v1340, %v1332
        %v1345 = vmin.f32 %v1341, %v1333
        %v1346 = vmin.f32 %v1342, %v1334
        %v1347 = vmin.f32 %v1343, %v1344
        %v1348 = vmin.f32 %v1345, %v1346
        %v1349 = vmin.f32 %v1347, %v1348
        %v1350 = vrot.slane %v1349, 4
        %v1351 = vmin.f32 %v1349, %v1350
        %v1352 = vrot.slane %v1351, 2
        %v1353 = vmin.f32 %v1351, %v1352
        %v1354 = vrot.slane %v1353, 1
        %v1355 = vmin.f32 %v1353, %v1354
        %v1357 = vand.u32 %v1355, 127
        %vm1358 = vcmp.eq.f32.partialorder %v1319, %v1355
        %vm1359 = vcmp.eq.f32.partialorder %v1320, %v1355
        %vm1360 = vcmp.eq.f32.partialorder %v1321, %v1355
        %vm1361 = vcmp.eq.f32.partialorder %v1322, %v1355
        %vm1362 = vcmp.eq.f32.partialorder %v1323, %v1355
        %vm1363 = vcmp.eq.f32.partialorder %v1324, %v1355
        %vm1364 = vcmp.eq.f32.partialorder %v1325, %v1355
        %vm1365 = vcmp.eq.f32.partialorder %v1326, %v1355
        %vm1366 = vcmp.eq.f32.partialorder %v1327, %v1355
        %vm1367 = vcmp.eq.f32.partialorder %v1328, %v1355
        %vm1368 = vcmp.eq.f32.partialorder %v1329, %v1355
        %vm1369 = vcmp.eq.f32.partialorder %v1330, %v1355
        %vm1370 = vcmp.eq.f32.partialorder %v1331, %v1355
        %vm1371 = vcmp.eq.f32.partialorder %v1332, %v1355
        %vm1372 = vcmp.eq.f32.partialorder %v1333, %v1355
        %vm1373 = vcmp.eq.f32.partialorder %v1334, %v1355
        %v1374 = vsel %vm1358, 1e+30, %v1319
        %v1375 = vsel %vm1359, 1e+30, %v1320
        %v1376 = vsel %vm1360, 1e+30, %v1321
        %v1377 = vsel %vm1361, 1e+30, %v1322
        %v1378 = vsel %vm1362, 1e+30, %v1323
        %v1379 = vsel %vm1363, 1e+30, %v1324
        %v1380 = vsel %vm1364, 1e+30, %v1325
        %v1381 = vsel %vm1365, 1e+30, %v1326
        %v1382 = vsel %vm1366, 1e+30, %v1327
        %v1383 = vsel %vm1367, 1e+30, %v1328
        %v1384 = vsel %vm1368, 1e+30, %v1329
        %v1385 = vsel %vm1369, 1e+30, %v1330
        %v1386 = vsel %vm1370, 1e+30, %v1331
        %v1387 = vsel %vm1371, 1e+30, %v1332
        %v1388 = vsel %vm1372, 1e+30, %v1333
        %v1389 = vsel %vm1373, 1e+30, %v1334
        %v1390 = vmin.f32 %v1374, %v1378
        %v1391 = vmin.f32 %v1375, %v1379
        %v1392 = vmin.f32 %v1376, %v1380
        %v1393 = vmin.f32 %v1377, %v1381
        %v1394 = vmin.f32 %v1390, %v1382
        %v1395 = vmin.f32 %v1391, %v1383
        %v1396 = vmin.f32 %v1392, %v1384
        %v1397 = vmin.f32 %v1393, %v1385
        %v1398 = vmin.f32 %v1394, %v1386
        %v1399 = vmin.f32 %v1395, %v1387
        %v1400 = vmin.f32 %v1396, %v1388
        %v1401 = vmin.f32 %v1397, %v1389
        %v1402 = vmin.f32 %v1398, %v1399
        %v1403 = vmin.f32 %v1400, %v1401
        %v1404 = vmin.f32 %v1402, %v1403
        %v1405 = vrot.slane %v1404, 4
        %v1406 = vmin.f32 %v1404, %v1405
        %v1407 = vrot.slane %v1406, 2
        %v1408 = vmin.f32 %v1406, %v1407
        %v1409 = vrot.slane %v1408, 1
        %v1410 = vmin.f32 %v1408, %v1409
        %v1412 = vand.u32 %v1410, 127
        %vm1413 = vcmp.eq.f32.partialorder %v1374, %v1410
        %vm1414 = vcmp.eq.f32.partialorder %v1375, %v1410
        %vm1415 = vcmp.eq.f32.partialorder %v1376, %v1410
        %vm1416 = vcmp.eq.f32.partialorder %v1377, %v1410
        %vm1417 = vcmp.eq.f32.partialorder %v1378, %v1410
        %vm1418 = vcmp.eq.f32.partialorder %v1379, %v1410
        %vm1419 = vcmp.eq.f32.partialorder %v1380, %v1410
        %vm1420 = vcmp.eq.f32.partialorder %v1381, %v1410
        %vm1421 = vcmp.eq.f32.partialorder %v1382, %v1410
        %vm1422 = vcmp.eq.f32.partialorder %v1383, %v1410
        %vm1423 = vcmp.eq.f32.partialorder %v1384, %v1410
        %vm1424 = vcmp.eq.f32.partialorder %v1385, %v1410
        %vm1425 = vcmp.eq.f32.partialorder %v1386, %v1410
        %vm1426 = vcmp.eq.f32.partialorder %v1387, %v1410
        %vm1427 = vcmp.eq.f32.partialorder %v1388, %v1410
        %vm1428 = vcmp.eq.f32.partialorder %v1389, %v1410
        %v1429 = vsel %vm1413, 1e+30, %v1374
        %v1430 = vsel %vm1414, 1e+30, %v1375
        %v1431 = vsel %vm1415, 1e+30, %v1376
        %v1432 = vsel %vm1416, 1e+30, %v1377
        %v1433 = vsel %vm1417, 1e+30, %v1378
        %v1434 = vsel %vm1418, 1e+30, %v1379
        %v1435 = vsel %vm1419, 1e+30, %v1380
        %v1436 = vsel %vm1420, 1e+30, %v1381
        %v1437 = vsel %vm1421, 1e+30, %v1382
        %v1438 = vsel %vm1422, 1e+30, %v1383
        %v1439 = vsel %vm1423, 1e+30, %v1384
        %v1440 = vsel %vm1424, 1e+30, %v1385
        %v1441 = vsel %vm1425, 1e+30, %v1386
        %v1442 = vsel %vm1426, 1e+30, %v1387
        %v1443 = vsel %vm1427, 1e+30, %v1388
        %v1444 = vsel %vm1428, 1e+30, %v1389
        %v1445 = vmin.f32 %v1429, %v1433
        %v1446 = vmin.f32 %v1430, %v1434
        %v1447 = vmin.f32 %v1431, %v1435
        %v1448 = vmin.f32 %v1432, %v1436
        %v1449 = vmin.f32 %v1445, %v1437
        %v1450 = vmin.f32 %v1446, %v1438
        %v1451 = vmin.f32 %v1447, %v1439
        %v1452 = vmin.f32 %v1448, %v1440
        %v1453 = vmin.f32 %v1449, %v1441
        %v1454 = vmin.f32 %v1450, %v1442
        %v1455 = vmin.f32 %v1451, %v1443
        %v1456 = vmin.f32 %v1452, %v1444
        %v1457 = vmin.f32 %v1453, %v1454
        %v1458 = vmin.f32 %v1455, %v1456
        %v1459 = vmin.f32 %v1457, %v1458
        %v1460 = vrot.slane %v1459, 4
        %v1461 = vmin.f32 %v1459, %v1460
        %v1462 = vrot.slane %v1461, 2
        %v1463 = vmin.f32 %v1461, %v1462
        %v1464 = vrot.slane %v1463, 1
        %v1465 = vmin.f32 %v1463, %v1464
        %v1467 = vand.u32 %v1465, 127
        %vm1468 = vcmp.eq.f32.partialorder %v1429, %v1465
        %vm1469 = vcmp.eq.f32.partialorder %v1430, %v1465
        %vm1470 = vcmp.eq.f32.partialorder %v1431, %v1465
        %vm1471 = vcmp.eq.f32.partialorder %v1432, %v1465
        %vm1472 = vcmp.eq.f32.partialorder %v1433, %v1465
        %vm1473 = vcmp.eq.f32.partialorder %v1434, %v1465
        %vm1474 = vcmp.eq.f32.partialorder %v1435, %v1465
        %vm1475 = vcmp.eq.f32.partialorder %v1436, %v1465
        %vm1476 = vcmp.eq.f32.partialorder %v1437, %v1465
        %vm1477 = vcmp.eq.f32.partialorder %v1438, %v1465
        %vm1478 = vcmp.eq.f32.partialorder %v1439, %v1465
        %vm1479 = vcmp.eq.f32.partialorder %v1440, %v1465
        %vm1480 = vcmp.eq.f32.partialorder %v1441, %v1465
        %vm1481 = vcmp.eq.f32.partialorder %v1442, %v1465
        %vm1482 = vcmp.eq.f32.partialorder %v1443, %v1465
        %vm1483 = vcmp.eq.f32.partialorder %v1444, %v1465
        %v1484 = vsel %vm1468, 1e+30, %v1429
        %v1485 = vsel %vm1469, 1e+30, %v1430
        %v1486 = vsel %vm1470, 1e+30, %v1431
        %v1487 = vsel %vm1471, 1e+30, %v1432
        %v1488 = vsel %vm1472, 1e+30, %v1433
        %v1489 = vsel %vm1473, 1e+30, %v1434
        %v1490 = vsel %vm1474, 1e+30, %v1435
        %v1491 = vsel %vm1475, 1e+30, %v1436
        %v1492 = vsel %vm1476, 1e+30, %v1437
        %v1493 = vsel %vm1477, 1e+30, %v1438
        %v1494 = vsel %vm1478, 1e+30, %v1439
        %v1495 = vsel %vm1479, 1e+30, %v1440
        %v1496 = vsel %vm1480, 1e+30, %v1441
        %v1497 = vsel %vm1481, 1e+30, %v1442
        %v1498 = vsel %vm1482, 1e+30, %v1443
        %v1499 = vsel %vm1483, 1e+30, %v1444
        %v1500 = vmin.f32 %v1484, %v1488
        %v1501 = vmin.f32 %v1485, %v1489
        %v1502 = vmin.f32 %v1486, %v1490
        %v1503 = vmin.f32 %v1487, %v1491
        %v1504 = vmin.f32 %v1500, %v1492
        %v1505 = vmin.f32 %v1501, %v1493
        %v1506 = vmin.f32 %v1502, %v1494
        %v1507 = vmin.f32 %v1503, %v1495
        %v1508 = vmin.f32 %v1504, %v1496
        %v1509 = vmin.f32 %v1505, %v1497
        %v1510 = vmin.f32 %v1506, %v1498
        %v1511 = vmin.f32 %v1507, %v1499
        %v1512 = vmin.f32 %v1508, %v1509
        %v1513 = vmin.f32 %v1510, %v1511
        %v1514 = vmin.f32 %v1512, %v1513
        %v1515 = vrot.slane %v1514, 4
        %v1516 = vmin.f32 %v1514, %v1515
        %v1517 = vrot.slane %v1516, 2
        %v1518 = vmin.f32 %v1516, %v1517
        %v1519 = vrot.slane %v1518, 1
        %v1520 = vmin.f32 %v1518, %v1519
        %v1522 = vand.u32 %v1520, 127
        %vm1523 = vcmp.eq.f32.partialorder %v1484, %v1520
        %vm1524 = vcmp.eq.f32.partialorder %v1485, %v1520
        %vm1525 = vcmp.eq.f32.partialorder %v1486, %v1520
        %vm1526 = vcmp.eq.f32.partialorder %v1487, %v1520
        %vm1527 = vcmp.eq.f32.partialorder %v1488, %v1520
        %vm1528 = vcmp.eq.f32.partialorder %v1489, %v1520
        %vm1529 = vcmp.eq.f32.partialorder %v1490, %v1520
        %vm1530 = vcmp.eq.f32.partialorder %v1491, %v1520
        %vm1531 = vcmp.eq.f32.partialorder %v1492, %v1520
        %vm1532 = vcmp.eq.f32.partialorder %v1493, %v1520
        %vm1533 = vcmp.eq.f32.partialorder %v1494, %v1520
        %vm1534 = vcmp.eq.f32.partialorder %v1495, %v1520
        %vm1535 = vcmp.eq.f32.partialorder %v1496, %v1520
        %vm1536 = vcmp.eq.f32.partialorder %v1497, %v1520
        %vm1537 = vcmp.eq.f32.partialorder %v1498, %v1520
        %vm1538 = vcmp.eq.f32.partialorder %v1499, %v1520
        %v1539 = vsel %vm1523, 1e+30, %v1484
        %v1540 = vsel %vm1524, 1e+30, %v1485
        %v1541 = vsel %vm1525, 1e+30, %v1486
        %v1542 = vsel %vm1526, 1e+30, %v1487
        %v1543 = vsel %vm1527, 1e+30, %v1488
        %v1544 = vsel %vm1528, 1e+30, %v1489
        %v1545 = vsel %vm1529, 1e+30, %v1490
        %v1546 = vsel %vm1530, 1e+30, %v1491
        %v1547 = vsel %vm1531, 1e+30, %v1492
        %v1548 = vsel %vm1532, 1e+30, %v1493
        %v1549 = vsel %vm1533, 1e+30, %v1494
        %v1550 = vsel %vm1534, 1e+30, %v1495
        %v1551 = vsel %vm1535, 1e+30, %v1496
        %v1552 = vsel %vm1536, 1e+30, %v1497
        %v1553 = vsel %vm1537, 1e+30, %v1498
        %v1554 = vsel %vm1538, 1e+30, %v1499
        %v1555 = vmin.f32 %v1539, %v1543
        %v1556 = vmin.f32 %v1540, %v1544
        %v1557 = vmin.f32 %v1541, %v1545
        %v1558 = vmin.f32 %v1542, %v1546
        %v1559 = vmin.f32 %v1555, %v1547
        %v1560 = vmin.f32 %v1556, %v1548
        %v1561 = vmin.f32 %v1557, %v1549
        %v1562 = vmin.f32 %v1558, %v1550
        %v1563 = vmin.f32 %v1559, %v1551
        %v1564 = vmin.f32 %v1560, %v1552
        %v1565 = vmin.f32 %v1561, %v1553
        %v1566 = vmin.f32 %v1562, %v1554
        %v1567 = vmin.f32 %v1563, %v1564
        %v1568 = vmin.f32 %v1565, %v1566
        %v1569 = vmin.f32 %v1567, %v1568
        %v1570 = vrot.slane %v1569, 4
        %v1571 = vmin.f32 %v1569, %v1570
        %v1572 = vrot.slane %v1571, 2
        %v1573 = vmin.f32 %v1571, %v1572
        %v1574 = vrot.slane %v1573, 1
        %v1575 = vmin.f32 %v1573, %v1574
        %v1577 = vand.u32 %v1575, 127
        %vm1578 = vcmp.eq.f32.partialorder %v1539, %v1575
        %vm1579 = vcmp.eq.f32.partialorder %v1540, %v1575
        %vm1580 = vcmp.eq.f32.partialorder %v1541, %v1575
        %vm1581 = vcmp.eq.f32.partialorder %v1542, %v1575
        %vm1582 = vcmp.eq.f32.partialorder %v1543, %v1575
        %vm1583 = vcmp.eq.f32.partialorder %v1544, %v1575
        %vm1584 = vcmp.eq.f32.partialorder %v1545, %v1575
        %vm1585 = vcmp.eq.f32.partialorder %v1546, %v1575
        %vm1586 = vcmp.eq.f32.partialorder %v1547, %v1575
        %vm1587 = vcmp.eq.f32.partialorder %v1548, %v1575
        %vm1588 = vcmp.eq.f32.partialorder %v1549, %v1575
        %vm1589 = vcmp.eq.f32.partialorder %v1550, %v1575
        %vm1590 = vcmp.eq.f32.partialorder %v1551, %v1575
        %vm1591 = vcmp.eq.f32.partialorder %v1552, %v1575
        %vm1592 = vcmp.eq.f32.partialorder %v1553, %v1575
        %vm1593 = vcmp.eq.f32.partialorder %v1554, %v1575
        %v1594 = vsel %vm1578, 1e+30, %v1539
        %v1595 = vsel %vm1579, 1e+30, %v1540
        %v1596 = vsel %vm1580, 1e+30, %v1541
        %v1597 = vsel %vm1581, 1e+30, %v1542
        %v1598 = vsel %vm1582, 1e+30, %v1543
        %v1599 = vsel %vm1583, 1e+30, %v1544
        %v1600 = vsel %vm1584, 1e+30, %v1545
        %v1601 = vsel %vm1585, 1e+30, %v1546
        %v1602 = vsel %vm1586, 1e+30, %v1547
        %v1603 = vsel %vm1587, 1e+30, %v1548
        %v1604 = vsel %vm1588, 1e+30, %v1549
        %v1605 = vsel %vm1589, 1e+30, %v1550
        %v1606 = vsel %vm1590, 1e+30, %v1551
        %v1607 = vsel %vm1591, 1e+30, %v1552
        %v1608 = vsel %vm1592, 1e+30, %v1553
        %v1609 = vsel %vm1593, 1e+30, %v1554
        %v1610 = vmin.f32 %v1594, %v1598
        %v1611 = vmin.f32 %v1595, %v1599
        %v1612 = vmin.f32 %v1596, %v1600
        %v1613 = vmin.f32 %v1597, %v1601
        %v1614 = vmin.f32 %v1610, %v1602
        %v1615 = vmin.f32 %v1611, %v1603
        %v1616 = vmin.f32 %v1612, %v1604
        %v1617 = vmin.f32 %v1613, %v1605
        %v1618 = vmin.f32 %v1614, %v1606
        %v1619 = vmin.f32 %v1615, %v1607
        %v1620 = vmin.f32 %v1616, %v1608
        %v1621 = vmin.f32 %v1617, %v1609
        %v1622 = vmin.f32 %v1618, %v1619
        %v1623 = vmin.f32 %v1620, %v1621
        %v1624 = vmin.f32 %v1622, %v1623
        %v1625 = vrot.slane %v1624, 4
        %v1626 = vmin.f32 %v1624, %v1625
        %v1627 = vrot.slane %v1626, 2
        %v1628 = vmin.f32 %v1626, %v1627
        %v1629 = vrot.slane %v1628, 1
        %v1630 = vmin.f32 %v1628, %v1629
        %v1632 = vand.u32 %v1630, 127
        %v1633 = vsel %vm242, %v1247, %v1302
        %vm1634 = vcmask 1041408
        %v1635 = vsel %vm1634, %v1633, %v1357
        %vm1636 = vcmask 1042432
        %v1637 = vsel %vm1636, %v1635, %v1412
        %vm1638 = vcmask 1043456
        %v1639 = vsel %vm1638, %v1637, %v1467
        %vm1640 = vcmask 1044480
        %v1641 = vsel %vm1640, %v1639, %v1522
        %vm1642 = vcmask 1045504
        %v1643 = vsel %vm1642, %v1641, %v1577
        %vm1644 = vcmask 1046528
        %v1645 = vsel %vm1644, %v1643, %v1632
        %v1647 = vsel %vm240, %v255, 0.0
        %v1648 = vsel %vm240, 1, 0
        %v1649 = vcvt.s32.f32 %v1648
        %v1651 = vrot.slane %v225, 7
        %v1654 = vrot.slane %v1647, 6
        %v1657 = vrot.slane %v227, 5
        %v1660 = vrot.slane %v1649, 4
        %v1662 = vsel %vm242, %v224, %v1651
        %v1663 = vsel %vm1634, %v1662, %v1654
        %v1664 = vsel %vm1636, %v1663, %v1657
        %v1665 = vsel %vm1638, %v1664, %v1660
        %v1666 = vsel %vm1640, %v1665, 0.0
        %1667 = vst [vmem:[%s211] sm:$0xff] %v1666
        %1668 = vst [vmem:[%s211 + $0x8] sm:$0xff] %v1645
        %s1669 = sand.u32 %s91, 1
        %s1670 = scalar_lea.sflag [#allocation6], %s1669
        %s1671 = sand.u32 %s91, 1
        %s1672 = smul.addr %s1671, 16
        %s1673 = scalar_lea.vmem [#allocation9], %s1672
        // Predicated region
        $region37: #{tpu_custom_call.1} parent=27 // pred_check
          %p1674 = pneg %p101
        $region38: #{tpu_custom_call.1} parent=27 // pred_check_branch
          %1676 = sbr.rel (%p1674) target = $region40
        $region39: #{tpu_custom_call.1} parent=27 // pred_region
          %1678 = vsyncadd %s1670, 0
          %s1679 = smul.addr %s31, 2
          %s1680 = smul.addr %s1679, 8
          %s1681 = scalar_lea.hbm %s3, %s1680
          %s1682 = sshll.u32 %s1673, 4
          %s1683 = int_to_ptr.vmem [resolvable:$true] %s1682
          %s1684 = sshll.u32 %s1681, 4
          %s1685 = int_to_ptr.hbm [resolvable:$true] %s1684
          %1690 = dma.vmem_to_hbm [thread:$0]  %s1683, 256, %s1685, %s1670, 128, 128, 8
        $region40: #{tpu_custom_call.1} parent=27 // pred_fallthru
          _
      $region28: #{tpu_custom_call.1} parent=5 // pred_fallthru
        _
      %p1691 = scmp.le.s32.totalorder 2, %s26
      // Predicated region
      $region41: #{tpu_custom_call.1} parent=5 // pred_check
        %p1692 = pneg %p1691
      $region42: #{tpu_custom_call.1} parent=5 // pred_check_branch
        %1694 = sbr.rel (%p1692) target = $region44
      $region43: #{tpu_custom_call.1} parent=5 // pred_region
        %s1695 = ssub.s32 %s26, 2
        // Predicated region
        $region45: #{tpu_custom_call.1} parent=43 // pred_check
          %p1696 = pneg %p107
        $region46: #{tpu_custom_call.1} parent=43 // pred_check_branch
          %1698 = sbr.rel (%p1696) target = $region48
        $region47: #{tpu_custom_call.1} parent=43 // pred_region
          %s1699 = sand.u32 %s92, 1
          %s1700 = scalar_lea.sflag [#allocation6], %s1699
          %s1701 = sand.u32 %s92, 1
          %s1702 = smul.addr %s1701, 16
          %s1703 = scalar_lea.vmem [#allocation9], %s1702
          %1705 = dma.done %s1700, 256
        $region48: #{tpu_custom_call.1} parent=43 // pred_fallthru
          _
      $region44: #{tpu_custom_call.1} parent=5 // pred_fallthru
        _
    $region6: #{tpu_custom_call.1} parent=1 // loop_footer
      %s30 = sadd.s32 1, %s26
    $region7: #{tpu_custom_call.1} parent=1 // loop_footer_branch
      %25 = sbr.rel target = $region3
    $region8: #{tpu_custom_call.1} parent=1 // loop_exit
      _
    %1706 = vsyncpa [#allocation5], 1
    %s1707 = scalar_lea.sflag [#allocation5], 1
    %1708 = vsyncpa %s1707, 1
    %1709 = vsyncpa [#allocation8], 1
    %s1710 = scalar_lea.sflag [#allocation8], 1
    %1711 = vsyncpa %s1710, 1
    %1712 = vsyncpa [#allocation6], 1
    %s1713 = scalar_lea.sflag [#allocation6], 1
    %1714 = vsyncpa %s1713, 1

</llo_original>
